<compile_context>
chip_gen: v6e
topology: v6e:2x2x1
jax: 0.10.0
libtpu: 0.0.40
codegen_flags: <defaults>
</compile_context>

<pallas_src>
import functools

import jax
import jax.numpy as jnp
from jax.experimental import pallas as pl
from jax.experimental.pallas import tpu as pltpu

# ---------------- Model configuration (small, consistent with the module) ----------------
IMG_SHAPE = (4, 16, 16)    # (C, H, W)
CHANS = [8, 8]
KSIZES = (7, 5, 5)         # effective kernel size per layer (incl. final GC layer)
N_UNITS = 5
N_LAYERS = 3
STACK_KSIZE = 3            # LinearStackedConv2d sub-kernel size
EPS = 1e-3                 # AbsBatchNorm eps used by the module
BATCH = 2
FRAME_H, FRAME_W = IMG_SHAPE[1], IMG_SHAPE[2]
SUBLANE = 8                # f32 sublane tile; input channels padded to this


# ================================ Fused Pallas kernel ================================
def _conv_stacked(x, w_ref, ksize, frame_w, m):
    """Valid cross-correlation as ONE deep MXU matmul.

    x:      (cin, M) f32 activation; column index = b*FH*FW + y*FW + col.
    w_ref:  (cout, ksize*ksize*cin) bf16 tap-major weights; tap (i, j) occupies
            columns (i*ksize + j)*cin : +cin (torch weight.transpose(0, 2, 3, 1)).

    For tap (i, j), output column p needs input column p + (i*FW + j); a
    circular lane roll by (M - off) brings it into place (pltpu.roll follows
    jnp.roll semantics: out[p] = in[(p - shift) % M]).  The k*k rolled slabs are
    concatenated tap-major (cin = 8 everywhere, so sublane offsets are
    tile-aligned), cast once to bf16 and contracted against the whole weight in
    a single (cout, k*k*cin) @ (k*k*cin, M) dot with f32 accumulation.
    Circular wrap / cross-batch leakage only lands in columns outside the valid
    output window, which are zeroed by the zero-filled BN frames / readout.
    """
    slabs = []
    for i in range(ksize):
        for j in range(ksize):
            off = i * frame_w + j
            slabs.append(x if off == 0 else pltpu.roll(x, m - off, axis=1))
    rhs = jnp.concatenate(slabs, axis=0).astype(jnp.bfloat16)    # (k*k*cin, M)
    return jnp.dot(w_ref[...], rhs, preferred_element_type=jnp.float32)


def make_fused_kernel(stack_cfg, gc_ksize, frame_w, m):
    """stack_cfg: per stacked layer, a tuple of sub-conv kernel sizes."""

    def kernel(*refs):
        refs = list(refs)
        out_ref = refs.pop()
        it = iter(refs)

        x = next(it)[...]                                     # (C0p, M) f32 input frame

        # --- stacked layers: LinearStackedConv2d -> Flatten -> AbsBatchNorm1d
        #     -> Reshape -> GaussianNoise (eval: identity) -> ReLU ---
        for sub_ksizes in stack_cfg:
            w_refs = [next(it) for _ in sub_ksizes]
            bn_a = next(it)[...]                              # (C, M) frame-embedded, 0 off-window
            bn_b = next(it)[...]
            for ks, w_ref in zip(sub_ksizes, w_refs):         # chain of linear convs
                x = _conv_stacked(x, w_ref, ks, frame_w, m)
            # conv bias + AbsBatchNorm1d(|scale|, running stats) folded into (a, b);
            # a = b = 0 outside the valid window zeroes wrap / cross-batch lanes.
            x = jnp.maximum(x * bn_a + bn_b, 0.0)             # BN + ReLU epilogue (f32)

        # --- final Conv2d -> AbsBatchNorm2d -> Softplus -> OneHot readout ---
        w_gc = next(it)
        gc_a = next(it)[...]                                  # (n_units, 1)
        gc_b = next(it)[...]
        onehot = next(it)[...]                                # (n_units, M) frame-embedded
        bsel = next(it)[...]                                  # (B, M) batch selector
        x = _conv_stacked(x, w_gc, gc_ksize, frame_w, m)
        y = x * gc_a + gc_b                                   # bias + AbsBatchNorm2d
        # torch.nn.Softplus(beta=1, threshold=20)
        sp = jnp.where(y > 20.0, y, jnp.log1p(jnp.exp(jnp.minimum(y, 20.0))))
        # OneHot spatial readout: out[b, u] = sum_m bsel[b, m] * (sp * onehot)[u, m]
        out_ref[...] = jax.lax.dot_general(
            bsel, sp * onehot, (((1,), (1,)), ((), ())),
            preferred_element_type=jnp.float32)

    return kernel


# ================================ One-time parameter prep ================================
def _bn_affine(bn, bias):
    """Fold preceding conv bias + AbsBatchNorm (eval, running stats, |scale|)
    into a single affine y = x*a + b."""
    a = jnp.abs(bn["scale"]) * jax.lax.rsqrt(bn["var"] + EPS)
    b = (bias - bn["mean"]) * a + bn["shift"]
    return a.astype(jnp.float32), b.astype(jnp.float32)


def _embed_frame(p, fill, batch):
    """Embed (C, Hv, Wv) per-position params into the (C, B*FH*FW) lane frame
    used by the kernel (valid window sits at the top-left of each batch block)."""
    c, hv, wv = p.shape
    f = jnp.full((c, FRAME_H, FRAME_W), fill, jnp.float32)
    f = f.at[:, :hv, :wv].set(p.astype(jnp.float32))
    f = jnp.broadcast_to(f[:, None], (c, batch, FRAME_H, FRAME_W))
    return f.reshape(c, batch * FRAME_H * FRAME_W)


def _tap_major(w, cin_pad):
    """(cout, cin, kh, kw) torch conv weight -> (cout, kh*kw*cin_pad) tap-major bf16."""
    cout, cin, kh, kw = w.shape
    if cin_pad > cin:
        w = jnp.pad(w, ((0, 0), (0, cin_pad - cin), (0, 0), (0, 0)))
    return (jnp.transpose(w, (0, 2, 3, 1))
            .reshape(cout, kh * kw * cin_pad).astype(jnp.bfloat16))


def preprocess_params(params, batch):
    """One-time, per-model prep (hoisted out of the per-call wrapper):
    tap-major bf16 conv weights (input channels padded to a full sublane tile),
    conv-bias + AbsBatchNorm folded into frame-embedded affines (fill 0 outside
    the valid window), onehot readout frame and batch selector."""
    c0 = IMG_SHAPE[0]
    c0_pad = ((c0 + SUBLANE - 1) // SUBLANE) * SUBLANE
    inputs = []
    stack_cfg = []
    total_mac = 0
    for li, convs in enumerate(params["stacked_convs"]):
        sub_ksizes = []
        bias = None
        for si, (w, b) in enumerate(convs):                   # LinearStackedConv2d chain
            cout, cin, kh, kw = w.shape
            pad_to = c0_pad if (li == 0 and si == 0) else cin
            inputs.append(_tap_major(w, pad_to))
            sub_ksizes.append(kh)
            total_mac += cout * cin * kh * kw
            if b is not None:
                bias = b                                      # bias only on last sub-conv
        stack_cfg.append(tuple(sub_ksizes))
        bn = params["bn1d"][li]
        bias_c = (jnp.zeros((bn["mean"].shape[0],), jnp.float32)
                  if bias is None else bias)
        a, b_aff = _bn_affine(bn, bias_c[:, None, None])
        inputs.append(_embed_frame(a, 0.0, batch))            # fill 0: zero invalid lanes
        inputs.append(_embed_frame(b_aff, 0.0, batch))

    wgc, bgc = params["final_conv"]
    cout, cin, kh, kw = wgc.shape
    inputs.append(_tap_major(wgc, cin))
    gc_ksize = kh
    total_mac += cout * cin * kh * kw
    a2, b2 = _bn_affine(params["bn2d"], bgc)
    inputs.append(a2.reshape(N_UNITS, 1))
    inputs.append(b2.reshape(N_UNITS, 1))
    inputs.append(_embed_frame(params["onehot"], 0.0, batch))  # per-unit readout weights
    inputs.append(jnp.repeat(jnp.eye(batch, dtype=jnp.float32),
                             FRAME_H * FRAME_W, axis=1))       # batch selector
    return dict(inputs=tuple(inputs), stack_cfg=tuple(stack_cfg),
                gc_ksize=gc_ksize, total_mac=total_mac, c0_pad=c0_pad)


# ================================ JAX forward wrapper ================================
def retinotopic_forward(prepped, x):
    """Eval-mode forward of RetinotopicModel. x: (B, C, H, W) NCHW -> (B, n_units)."""
    B, C, H, W = x.shape
    M = B * H * W
    c0_pad = prepped["c0_pad"]

    # Channels-major frame: act0[c, b*H*W + y*W + col] = x[b, c, y, col];
    # channels zero-padded to a full 8-row sublane tile.
    act0 = jnp.transpose(x, (1, 0, 2, 3)).reshape(C, M).astype(jnp.float32)
    if c0_pad > C:
        act0 = jnp.pad(act0, ((0, c0_pad - C), (0, 0)))

    kernel = make_fused_kernel(prepped["stack_cfg"], prepped["gc_ksize"], W, M)
    inputs = (act0,) + prepped["inputs"]
    bytes_accessed = sum(int(v.size) * v.dtype.itemsize for v in inputs) + B * N_UNITS * 4
    # TODO(synk): for B >> 2 add a leading batch-chunk grid axis with
    # dimension_semantics=("parallel",) so v7x's second TensorCore is used.
    return pl.pallas_call(
        kernel,
        out_shape=jax.ShapeDtypeStruct((B, N_UNITS), jnp.float32),
        cost_estimate=pl.CostEstimate(
            flops=2 * M * prepped["total_mac"],
            transcendentals=2 * N_UNITS * M,
            bytes_accessed=bytes_accessed),
    )(*inputs)


# ================================ Synthetic parameters ================================
def init_params(key):
    """Deterministic synthetic parameters matching the module's __init__ shapes."""
    keys = iter(jax.random.split(key, 64))

    def conv_w(cin, cout, k):
        fan_in = cin * k * k
        return jax.random.normal(next(keys), (cout, cin, k, k), jnp.float32) / jnp.sqrt(fan_in)

    params = {}
    temp_chans = [IMG_SHAPE[0]] + CHANS
    h, w = IMG_SHAPE[1], IMG_SHAPE[2]

    stacked, bn1d = [], []
    for i in range(N_LAYERS - 1):
        cin, cout = temp_chans[i], temp_chans[i + 1]
        n_sub = (KSIZES[i] - 1) // (STACK_KSIZE - 1)
        convs = []
        ch_in = cin
        for s in range(n_sub):                      # stack_chans default to out channels
            wgt = conv_w(ch_in, cout, STACK_KSIZE)
            b = (0.01 * jax.random.normal(next(keys), (cout,), jnp.float32)
                 if s == n_sub - 1 else None)       # bias only on last sub-conv
            convs.append((wgt, b))
            ch_in = cout
        stacked.append(convs)
        h -= KSIZES[i] - 1
        w -= KSIZES[i] - 1
        # AbsBatchNorm1d over flattened (C, h, w) -- spatially heterogeneous.
        bn1d.append(dict(
            mean=0.1 * jax.random.normal(next(keys), (cout, h, w), jnp.float32),
            var=0.5 + jax.random.uniform(next(keys), (cout, h, w), jnp.float32),
            scale=1.0 + 0.1 * jax.random.normal(next(keys), (cout, h, w), jnp.float32),
            shift=0.1 * jax.random.normal(next(keys), (cout, h, w), jnp.float32),
        ))
    params["stacked_convs"] = stacked
    params["bn1d"] = bn1d

    params["final_conv"] = (conv_w(CHANS[-1], N_UNITS, KSIZES[-1]),
                            0.01 * jax.random.normal(next(keys), (N_UNITS,), jnp.float32))
    h -= KSIZES[-1] - 1
    w -= KSIZES[-1] - 1
    params["bn2d"] = dict(
        mean=0.1 * jax.random.normal(next(keys), (N_UNITS,), jnp.float32),
        var=0.5 + jax.random.uniform(next(keys), (N_UNITS,), jnp.float32),
        scale=1.0 + 0.1 * jax.random.normal(next(keys), (N_UNITS,), jnp.float32),
        shift=0.1 * jax.random.normal(next(keys), (N_UNITS,), jnp.float32),
    )
    # OneHot readout (rand_onehot=False): every weight = 1/(h*w).
    params["onehot"] = jnp.full((N_UNITS, h, w), 1.0 / (h * w), jnp.float32)
    return params


if __name__ == "__main__":
    key = jax.random.PRNGKey(0)
    pkey, xkey = jax.random.split(key)
    params = init_params(pkey)
    prepped = preprocess_params(params, BATCH)      # one-time prep, hoisted out of forward
    x = jax.random.normal(xkey, (BATCH,) + IMG_SHAPE, jnp.float32)

    fwd = jax.jit(functools.partial(retinotopic_forward, prepped))
    out = fwd(x)
    jax.block_until_ready(out)
    assert out.shape == (BATCH, N_UNITS), out.shape
    assert jnp.all(jnp.isfinite(out))
    print("KERNEL_OK")
</pallas_src>

<mosaic_0001>
module attributes {stable_mosaic.version = 11 : i64} {
  func.func @kernel(%arg0: memref<8x512xf32, #tpu.memory_space<vmem>>, %arg1: memref<8x72xbf16, #tpu.memory_space<vmem>>, %arg2: memref<8x72xbf16, #tpu.memory_space<vmem>>, %arg3: memref<8x72xbf16, #tpu.memory_space<vmem>>, %arg4: memref<8x512xf32, #tpu.memory_space<vmem>>, %arg5: memref<8x512xf32, #tpu.memory_space<vmem>>, %arg6: memref<8x72xbf16, #tpu.memory_space<vmem>>, %arg7: memref<8x72xbf16, #tpu.memory_space<vmem>>, %arg8: memref<8x512xf32, #tpu.memory_space<vmem>>, %arg9: memref<8x512xf32, #tpu.memory_space<vmem>>, %arg10: memref<5x200xbf16, #tpu.memory_space<vmem>>, %arg11: memref<5x1xf32, #tpu.memory_space<vmem>>, %arg12: memref<5x1xf32, #tpu.memory_space<vmem>>, %arg13: memref<5x512xf32, #tpu.memory_space<vmem>>, %arg14: memref<2x512xf32, #tpu.memory_space<vmem>>, %arg15: memref<2x5xf32, #tpu.memory_space<vmem>>) attributes {dimension_semantics = [], scalar_prefetch = 0 : i64, scratch_operands = 0 : i64, tpu.core_type = #tpu.core_type<tc>} {
    %c0 = arith.constant 0 : index
    %c0_0 = arith.constant 0 : index
    %0 = vector.load %arg0[%c0, %c0_0] : memref<8x512xf32, #tpu.memory_space<vmem>>, vector<8x512xf32>
    %c0_1 = arith.constant 0 : index
    %c0_2 = arith.constant 0 : index
    %1 = vector.load %arg4[%c0_1, %c0_2] : memref<8x512xf32, #tpu.memory_space<vmem>>, vector<8x512xf32>
    %c0_3 = arith.constant 0 : index
    %c0_4 = arith.constant 0 : index
    %2 = vector.load %arg5[%c0_3, %c0_4] : memref<8x512xf32, #tpu.memory_space<vmem>>, vector<8x512xf32>
    %c511_i32 = arith.constant 511 : i32
    %3 = tpu.dynamic_rotate %0 by %c511_i32 dim 1 : vector<8x512xf32>, i32 -> vector<8x512xf32>
    %c510_i32 = arith.constant 510 : i32
    %4 = tpu.dynamic_rotate %0 by %c510_i32 dim 1 : vector<8x512xf32>, i32 -> vector<8x512xf32>
    %c496_i32 = arith.constant 496 : i32
    %5 = tpu.dynamic_rotate %0 by %c496_i32 dim 1 : vector<8x512xf32>, i32 -> vector<8x512xf32>
    %c495_i32 = arith.constant 495 : i32
    %6 = tpu.dynamic_rotate %0 by %c495_i32 dim 1 : vector<8x512xf32>, i32 -> vector<8x512xf32>
    %c494_i32 = arith.constant 494 : i32
    %7 = tpu.dynamic_rotate %0 by %c494_i32 dim 1 : vector<8x512xf32>, i32 -> vector<8x512xf32>
    %c480_i32 = arith.constant 480 : i32
    %8 = tpu.dynamic_rotate %0 by %c480_i32 dim 1 : vector<8x512xf32>, i32 -> vector<8x512xf32>
    %c479_i32 = arith.constant 479 : i32
    %9 = tpu.dynamic_rotate %0 by %c479_i32 dim 1 : vector<8x512xf32>, i32 -> vector<8x512xf32>
    %c478_i32 = arith.constant 478 : i32
    %10 = tpu.dynamic_rotate %0 by %c478_i32 dim 1 : vector<8x512xf32>, i32 -> vector<8x512xf32>
    %11 = tpu.concatenate %0, %3, %4, %5, %6, %7, %8, %9, %10 in 0 : vector<8x512xf32>, vector<8x512xf32>, vector<8x512xf32>, vector<8x512xf32>, vector<8x512xf32>, vector<8x512xf32>, vector<8x512xf32>, vector<8x512xf32>, vector<8x512xf32> -> vector<72x512xf32>
    %12 = arith.truncf %11 : vector<72x512xf32> to vector<72x512xbf16>
    %c0_5 = arith.constant 0 : index
    %c0_6 = arith.constant 0 : index
    %13 = vector.load %arg1[%c0_5, %c0_6] : memref<8x72xbf16, #tpu.memory_space<vmem>>, vector<8x72xbf16>
    %cst = arith.constant dense<0.000000e+00> : vector<8x512xf32>
    %14 = tpu.matmul %13, %12, %cst {dimension_numbers = #tpu.dot_dimension_numbers<[1], [0], [0], [1], [0, 0, 1, 1], [], []>} : vector<8x72xbf16>, vector<72x512xbf16>, vector<8x512xf32> -> vector<8x512xf32>
    %c511_i32_7 = arith.constant 511 : i32
    %15 = tpu.dynamic_rotate %14 by %c511_i32_7 dim 1 : vector<8x512xf32>, i32 -> vector<8x512xf32>
    %c510_i32_8 = arith.constant 510 : i32
    %16 = tpu.dynamic_rotate %14 by %c510_i32_8 dim 1 : vector<8x512xf32>, i32 -> vector<8x512xf32>
    %c496_i32_9 = arith.constant 496 : i32
    %17 = tpu.dynamic_rotate %14 by %c496_i32_9 dim 1 : vector<8x512xf32>, i32 -> vector<8x512xf32>
    %c495_i32_10 = arith.constant 495 : i32
    %18 = tpu.dynamic_rotate %14 by %c495_i32_10 dim 1 : vector<8x512xf32>, i32 -> vector<8x512xf32>
    %c494_i32_11 = arith.constant 494 : i32
    %19 = tpu.dynamic_rotate %14 by %c494_i32_11 dim 1 : vector<8x512xf32>, i32 -> vector<8x512xf32>
    %c480_i32_12 = arith.constant 480 : i32
    %20 = tpu.dynamic_rotate %14 by %c480_i32_12 dim 1 : vector<8x512xf32>, i32 -> vector<8x512xf32>
    %c479_i32_13 = arith.constant 479 : i32
    %21 = tpu.dynamic_rotate %14 by %c479_i32_13 dim 1 : vector<8x512xf32>, i32 -> vector<8x512xf32>
    %c478_i32_14 = arith.constant 478 : i32
    %22 = tpu.dynamic_rotate %14 by %c478_i32_14 dim 1 : vector<8x512xf32>, i32 -> vector<8x512xf32>
    %23 = tpu.concatenate %14, %15, %16, %17, %18, %19, %20, %21, %22 in 0 : vector<8x512xf32>, vector<8x512xf32>, vector<8x512xf32>, vector<8x512xf32>, vector<8x512xf32>, vector<8x512xf32>, vector<8x512xf32>, vector<8x512xf32>, vector<8x512xf32> -> vector<72x512xf32>
    %24 = arith.truncf %23 : vector<72x512xf32> to vector<72x512xbf16>
    %c0_15 = arith.constant 0 : index
    %c0_16 = arith.constant 0 : index
    %25 = vector.load %arg2[%c0_15, %c0_16] : memref<8x72xbf16, #tpu.memory_space<vmem>>, vector<8x72xbf16>
    %cst_17 = arith.constant dense<0.000000e+00> : vector<8x512xf32>
    %26 = tpu.matmul %25, %24, %cst_17 {dimension_numbers = #tpu.dot_dimension_numbers<[1], [0], [0], [1], [0, 0, 1, 1], [], []>} : vector<8x72xbf16>, vector<72x512xbf16>, vector<8x512xf32> -> vector<8x512xf32>
    %c511_i32_18 = arith.constant 511 : i32
    %27 = tpu.dynamic_rotate %26 by %c511_i32_18 dim 1 : vector<8x512xf32>, i32 -> vector<8x512xf32>
    %c510_i32_19 = arith.constant 510 : i32
    %28 = tpu.dynamic_rotate %26 by %c510_i32_19 dim 1 : vector<8x512xf32>, i32 -> vector<8x512xf32>
    %c496_i32_20 = arith.constant 496 : i32
    %29 = tpu.dynamic_rotate %26 by %c496_i32_20 dim 1 : vector<8x512xf32>, i32 -> vector<8x512xf32>
    %c495_i32_21 = arith.constant 495 : i32
    %30 = tpu.dynamic_rotate %26 by %c495_i32_21 dim 1 : vector<8x512xf32>, i32 -> vector<8x512xf32>
    %c494_i32_22 = arith.constant 494 : i32
    %31 = tpu.dynamic_rotate %26 by %c494_i32_22 dim 1 : vector<8x512xf32>, i32 -> vector<8x512xf32>
    %c480_i32_23 = arith.constant 480 : i32
    %32 = tpu.dynamic_rotate %26 by %c480_i32_23 dim 1 : vector<8x512xf32>, i32 -> vector<8x512xf32>
    %c479_i32_24 = arith.constant 479 : i32
    %33 = tpu.dynamic_rotate %26 by %c479_i32_24 dim 1 : vector<8x512xf32>, i32 -> vector<8x512xf32>
    %c478_i32_25 = arith.constant 478 : i32
    %34 = tpu.dynamic_rotate %26 by %c478_i32_25 dim 1 : vector<8x512xf32>, i32 -> vector<8x512xf32>
    %35 = tpu.concatenate %26, %27, %28, %29, %30, %31, %32, %33, %34 in 0 : vector<8x512xf32>, vector<8x512xf32>, vector<8x512xf32>, vector<8x512xf32>, vector<8x512xf32>, vector<8x512xf32>, vector<8x512xf32>, vector<8x512xf32>, vector<8x512xf32> -> vector<72x512xf32>
    %36 = arith.truncf %35 : vector<72x512xf32> to vector<72x512xbf16>
    %c0_26 = arith.constant 0 : index
    %c0_27 = arith.constant 0 : index
    %37 = vector.load %arg3[%c0_26, %c0_27] : memref<8x72xbf16, #tpu.memory_space<vmem>>, vector<8x72xbf16>
    %cst_28 = arith.constant dense<0.000000e+00> : vector<8x512xf32>
    %38 = tpu.matmul %37, %36, %cst_28 {dimension_numbers = #tpu.dot_dimension_numbers<[1], [0], [0], [1], [0, 0, 1, 1], [], []>} : vector<8x72xbf16>, vector<72x512xbf16>, vector<8x512xf32> -> vector<8x512xf32>
    %39 = arith.mulf %38, %1 : vector<8x512xf32>
    %40 = arith.addf %39, %2 : vector<8x512xf32>
    %cst_29 = arith.constant 0.000000e+00 : f32
    %41 = vector.broadcast %cst_29 : f32 to vector<8x512xf32>
    %42 = arith.maximumf %40, %41 : vector<8x512xf32>
    %c0_30 = arith.constant 0 : index
    %c0_31 = arith.constant 0 : index
    %43 = vector.load %arg8[%c0_30, %c0_31] : memref<8x512xf32, #tpu.memory_space<vmem>>, vector<8x512xf32>
    %c0_32 = arith.constant 0 : index
    %c0_33 = arith.constant 0 : index
    %44 = vector.load %arg9[%c0_32, %c0_33] : memref<8x512xf32, #tpu.memory_space<vmem>>, vector<8x512xf32>
    %c511_i32_34 = arith.constant 511 : i32
    %45 = tpu.dynamic_rotate %42 by %c511_i32_34 dim 1 : vector<8x512xf32>, i32 -> vector<8x512xf32>
    %c510_i32_35 = arith.constant 510 : i32
    %46 = tpu.dynamic_rotate %42 by %c510_i32_35 dim 1 : vector<8x512xf32>, i32 -> vector<8x512xf32>
    %c496_i32_36 = arith.constant 496 : i32
    %47 = tpu.dynamic_rotate %42 by %c496_i32_36 dim 1 : vector<8x512xf32>, i32 -> vector<8x512xf32>
    %c495_i32_37 = arith.constant 495 : i32
    %48 = tpu.dynamic_rotate %42 by %c495_i32_37 dim 1 : vector<8x512xf32>, i32 -> vector<8x512xf32>
    %c494_i32_38 = arith.constant 494 : i32
    %49 = tpu.dynamic_rotate %42 by %c494_i32_38 dim 1 : vector<8x512xf32>, i32 -> vector<8x512xf32>
    %c480_i32_39 = arith.constant 480 : i32
    %50 = tpu.dynamic_rotate %42 by %c480_i32_39 dim 1 : vector<8x512xf32>, i32 -> vector<8x512xf32>
    %c479_i32_40 = arith.constant 479 : i32
    %51 = tpu.dynamic_rotate %42 by %c479_i32_40 dim 1 : vector<8x512xf32>, i32 -> vector<8x512xf32>
    %c478_i32_41 = arith.constant 478 : i32
    %52 = tpu.dynamic_rotate %42 by %c478_i32_41 dim 1 : vector<8x512xf32>, i32 -> vector<8x512xf32>
    %53 = tpu.concatenate %42, %45, %46, %47, %48, %49, %50, %51, %52 in 0 : vector<8x512xf32>, vector<8x512xf32>, vector<8x512xf32>, vector<8x512xf32>, vector<8x512xf32>, vector<8x512xf32>, vector<8x512xf32>, vector<8x512xf32>, vector<8x512xf32> -> vector<72x512xf32>
    %54 = arith.truncf %53 : vector<72x512xf32> to vector<72x512xbf16>
    %c0_42 = arith.constant 0 : index
    %c0_43 = arith.constant 0 : index
    %55 = vector.load %arg6[%c0_42, %c0_43] : memref<8x72xbf16, #tpu.memory_space<vmem>>, vector<8x72xbf16>
    %cst_44 = arith.constant dense<0.000000e+00> : vector<8x512xf32>
    %56 = tpu.matmul %55, %54, %cst_44 {dimension_numbers = #tpu.dot_dimension_numbers<[1], [0], [0], [1], [0, 0, 1, 1], [], []>} : vector<8x72xbf16>, vector<72x512xbf16>, vector<8x512xf32> -> vector<8x512xf32>
    %c511_i32_45 = arith.constant 511 : i32
    %57 = tpu.dynamic_rotate %56 by %c511_i32_45 dim 1 : vector<8x512xf32>, i32 -> vector<8x512xf32>
    %c510_i32_46 = arith.constant 510 : i32
    %58 = tpu.dynamic_rotate %56 by %c510_i32_46 dim 1 : vector<8x512xf32>, i32 -> vector<8x512xf32>
    %c496_i32_47 = arith.constant 496 : i32
    %59 = tpu.dynamic_rotate %56 by %c496_i32_47 dim 1 : vector<8x512xf32>, i32 -> vector<8x512xf32>
    %c495_i32_48 = arith.constant 495 : i32
    %60 = tpu.dynamic_rotate %56 by %c495_i32_48 dim 1 : vector<8x512xf32>, i32 -> vector<8x512xf32>
    %c494_i32_49 = arith.constant 494 : i32
    %61 = tpu.dynamic_rotate %56 by %c494_i32_49 dim 1 : vector<8x512xf32>, i32 -> vector<8x512xf32>
    %c480_i32_50 = arith.constant 480 : i32
    %62 = tpu.dynamic_rotate %56 by %c480_i32_50 dim 1 : vector<8x512xf32>, i32 -> vector<8x512xf32>
    %c479_i32_51 = arith.constant 479 : i32
    %63 = tpu.dynamic_rotate %56 by %c479_i32_51 dim 1 : vector<8x512xf32>, i32 -> vector<8x512xf32>
    %c478_i32_52 = arith.constant 478 : i32
    %64 = tpu.dynamic_rotate %56 by %c478_i32_52 dim 1 : vector<8x512xf32>, i32 -> vector<8x512xf32>
    %65 = tpu.concatenate %56, %57, %58, %59, %60, %61, %62, %63, %64 in 0 : vector<8x512xf32>, vector<8x512xf32>, vector<8x512xf32>, vector<8x512xf32>, vector<8x512xf32>, vector<8x512xf32>, vector<8x512xf32>, vector<8x512xf32>, vector<8x512xf32> -> vector<72x512xf32>
    %66 = arith.truncf %65 : vector<72x512xf32> to vector<72x512xbf16>
    %c0_53 = arith.constant 0 : index
    %c0_54 = arith.constant 0 : index
    %67 = vector.load %arg7[%c0_53, %c0_54] : memref<8x72xbf16, #tpu.memory_space<vmem>>, vector<8x72xbf16>
    %cst_55 = arith.constant dense<0.000000e+00> : vector<8x512xf32>
    %68 = tpu.matmul %67, %66, %cst_55 {dimension_numbers = #tpu.dot_dimension_numbers<[1], [0], [0], [1], [0, 0, 1, 1], [], []>} : vector<8x72xbf16>, vector<72x512xbf16>, vector<8x512xf32> -> vector<8x512xf32>
    %69 = arith.mulf %68, %43 : vector<8x512xf32>
    %70 = arith.addf %69, %44 : vector<8x512xf32>
    %cst_56 = arith.constant 0.000000e+00 : f32
    %71 = vector.broadcast %cst_56 : f32 to vector<8x512xf32>
    %72 = arith.maximumf %70, %71 : vector<8x512xf32>
    %c0_57 = arith.constant 0 : index
    %c0_58 = arith.constant 0 : index
    %73 = vector.load %arg11[%c0_57, %c0_58] : memref<5x1xf32, #tpu.memory_space<vmem>>, vector<5x1xf32>
    %c0_59 = arith.constant 0 : index
    %c0_60 = arith.constant 0 : index
    %74 = vector.load %arg12[%c0_59, %c0_60] : memref<5x1xf32, #tpu.memory_space<vmem>>, vector<5x1xf32>
    %c0_61 = arith.constant 0 : index
    %c0_62 = arith.constant 0 : index
    %75 = vector.load %arg13[%c0_61, %c0_62] : memref<5x512xf32, #tpu.memory_space<vmem>>, vector<5x512xf32>
    %c0_63 = arith.constant 0 : index
    %c0_64 = arith.constant 0 : index
    %76 = vector.load %arg14[%c0_63, %c0_64] : memref<2x512xf32, #tpu.memory_space<vmem>>, vector<2x512xf32>
    %c511_i32_65 = arith.constant 511 : i32
    %77 = tpu.dynamic_rotate %72 by %c511_i32_65 dim 1 : vector<8x512xf32>, i32 -> vector<8x512xf32>
    %c510_i32_66 = arith.constant 510 : i32
    %78 = tpu.dynamic_rotate %72 by %c510_i32_66 dim 1 : vector<8x512xf32>, i32 -> vector<8x512xf32>
    %c509_i32 = arith.constant 509 : i32
    %79 = tpu.dynamic_rotate %72 by %c509_i32 dim 1 : vector<8x512xf32>, i32 -> vector<8x512xf32>
    %c508_i32 = arith.constant 508 : i32
    %80 = tpu.dynamic_rotate %72 by %c508_i32 dim 1 : vector<8x512xf32>, i32 -> vector<8x512xf32>
    %c496_i32_67 = arith.constant 496 : i32
    %81 = tpu.dynamic_rotate %72 by %c496_i32_67 dim 1 : vector<8x512xf32>, i32 -> vector<8x512xf32>
    %c495_i32_68 = arith.constant 495 : i32
    %82 = tpu.dynamic_rotate %72 by %c495_i32_68 dim 1 : vector<8x512xf32>, i32 -> vector<8x512xf32>
    %c494_i32_69 = arith.constant 494 : i32
    %83 = tpu.dynamic_rotate %72 by %c494_i32_69 dim 1 : vector<8x512xf32>, i32 -> vector<8x512xf32>
    %c493_i32 = arith.constant 493 : i32
    %84 = tpu.dynamic_rotate %72 by %c493_i32 dim 1 : vector<8x512xf32>, i32 -> vector<8x512xf32>
    %c492_i32 = arith.constant 492 : i32
    %85 = tpu.dynamic_rotate %72 by %c492_i32 dim 1 : vector<8x512xf32>, i32 -> vector<8x512xf32>
    %c480_i32_70 = arith.constant 480 : i32
    %86 = tpu.dynamic_rotate %72 by %c480_i32_70 dim 1 : vector<8x512xf32>, i32 -> vector<8x512xf32>
    %c479_i32_71 = arith.constant 479 : i32
    %87 = tpu.dynamic_rotate %72 by %c479_i32_71 dim 1 : vector<8x512xf32>, i32 -> vector<8x512xf32>
    %c478_i32_72 = arith.constant 478 : i32
    %88 = tpu.dynamic_rotate %72 by %c478_i32_72 dim 1 : vector<8x512xf32>, i32 -> vector<8x512xf32>
    %c477_i32 = arith.constant 477 : i32
    %89 = tpu.dynamic_rotate %72 by %c477_i32 dim 1 : vector<8x512xf32>, i32 -> vector<8x512xf32>
    %c476_i32 = arith.constant 476 : i32
    %90 = tpu.dynamic_rotate %72 by %c476_i32 dim 1 : vector<8x512xf32>, i32 -> vector<8x512xf32>
    %c464_i32 = arith.constant 464 : i32
    %91 = tpu.dynamic_rotate %72 by %c464_i32 dim 1 : vector<8x512xf32>, i32 -> vector<8x512xf32>
    %c463_i32 = arith.constant 463 : i32
    %92 = tpu.dynamic_rotate %72 by %c463_i32 dim 1 : vector<8x512xf32>, i32 -> vector<8x512xf32>
    %c462_i32 = arith.constant 462 : i32
    %93 = tpu.dynamic_rotate %72 by %c462_i32 dim 1 : vector<8x512xf32>, i32 -> vector<8x512xf32>
    %c461_i32 = arith.constant 461 : i32
    %94 = tpu.dynamic_rotate %72 by %c461_i32 dim 1 : vector<8x512xf32>, i32 -> vector<8x512xf32>
    %c460_i32 = arith.constant 460 : i32
    %95 = tpu.dynamic_rotate %72 by %c460_i32 dim 1 : vector<8x512xf32>, i32 -> vector<8x512xf32>
    %c448_i32 = arith.constant 448 : i32
    %96 = tpu.dynamic_rotate %72 by %c448_i32 dim 1 : vector<8x512xf32>, i32 -> vector<8x512xf32>
    %c447_i32 = arith.constant 447 : i32
    %97 = tpu.dynamic_rotate %72 by %c447_i32 dim 1 : vector<8x512xf32>, i32 -> vector<8x512xf32>
    %c446_i32 = arith.constant 446 : i32
    %98 = tpu.dynamic_rotate %72 by %c446_i32 dim 1 : vector<8x512xf32>, i32 -> vector<8x512xf32>
    %c445_i32 = arith.constant 445 : i32
    %99 = tpu.dynamic_rotate %72 by %c445_i32 dim 1 : vector<8x512xf32>, i32 -> vector<8x512xf32>
    %c444_i32 = arith.constant 444 : i32
    %100 = tpu.dynamic_rotate %72 by %c444_i32 dim 1 : vector<8x512xf32>, i32 -> vector<8x512xf32>
    %101 = tpu.concatenate %72, %77, %78, %79, %80, %81, %82, %83, %84, %85, %86, %87, %88, %89, %90, %91 in 0 : vector<8x512xf32>, vector<8x512xf32>, vector<8x512xf32>, vector<8x512xf32>, vector<8x512xf32>, vector<8x512xf32>, vector<8x512xf32>, vector<8x512xf32>, vector<8x512xf32>, vector<8x512xf32>, vector<8x512xf32>, vector<8x512xf32>, vector<8x512xf32>, vector<8x512xf32>, vector<8x512xf32>, vector<8x512xf32> -> vector<128x512xf32>
    %102 = tpu.concatenate %92, %93, %94, %95, %96, %97, %98, %99, %100 in 0 : vector<8x512xf32>, vector<8x512xf32>, vector<8x512xf32>, vector<8x512xf32>, vector<8x512xf32>, vector<8x512xf32>, vector<8x512xf32>, vector<8x512xf32>, vector<8x512xf32> -> vector<72x512xf32>
    %103 = tpu.concatenate %101, %102 in 0 : vector<128x512xf32>, vector<72x512xf32> -> vector<200x512xf32>
    %104 = arith.truncf %103 : vector<200x512xf32> to vector<200x512xbf16>
    %c0_73 = arith.constant 0 : index
    %c0_74 = arith.constant 0 : index
    %105 = vector.load %arg10[%c0_73, %c0_74] : memref<5x200xbf16, #tpu.memory_space<vmem>>, vector<5x200xbf16>
    %cst_75 = arith.constant dense<0.000000e+00> : vector<5x512xf32>
    %106 = tpu.matmul %105, %104, %cst_75 {dimension_numbers = #tpu.dot_dimension_numbers<[1], [0], [0], [1], [0, 0, 1, 1], [], []>} : vector<5x200xbf16>, vector<200x512xbf16>, vector<5x512xf32> -> vector<5x512xf32>
    %107 = vector.broadcast %73 : vector<5x1xf32> to vector<5x512xf32>
    %108 = arith.mulf %106, %107 : vector<5x512xf32>
    %109 = vector.broadcast %74 : vector<5x1xf32> to vector<5x512xf32>
    %110 = arith.addf %108, %109 : vector<5x512xf32>
    %cst_76 = arith.constant 2.000000e+01 : f32
    %111 = vector.broadcast %cst_76 : f32 to vector<5x512xf32>
    %112 = arith.cmpf ogt, %110, %111 : vector<5x512xf32>
    %cst_77 = arith.constant 2.000000e+01 : f32
    %113 = vector.broadcast %cst_77 : f32 to vector<5x512xf32>
    %114 = arith.minimumf %110, %113 : vector<5x512xf32>
    %115 = math.exp %114 : vector<5x512xf32>
    %116 = math.log1p %115 : vector<5x512xf32>
    %117 = arith.select %112, %110, %116 : vector<5x512xi1>, vector<5x512xf32>
    %118 = arith.mulf %117, %75 : vector<5x512xf32>
    %cst_78 = arith.constant dense<0.000000e+00> : vector<2x5xf32>
    %119 = tpu.matmul %76, %118, %cst_78 {dimension_numbers = #tpu.dot_dimension_numbers<[1], [1], [0], [0], [0, 0, 1, 0], [], []>} : vector<2x512xf32>, vector<5x512xf32>, vector<2x5xf32> -> vector<2x5xf32>
    %c0_79 = arith.constant 0 : index
    %c0_80 = arith.constant 0 : index
    %120 = vector.load %arg15[%c0_79, %c0_80] : memref<2x5xf32, #tpu.memory_space<vmem>>, vector<2x5xf32>
    tpu.vector_store %arg15[%c0_79, %c0_80], %119 {strides = array<i32>} : memref<2x5xf32, #tpu.memory_space<vmem>>, vector<2x5xf32>,
    return
  }
}

</mosaic_0001>

<llo_original>
// kernel: retinotopic_forward.1
$region0: #{retinotopic_forward.1}
  #allocation0 [shape = 'u32[]', space=smem, size = 0x4, offset = 0x4, fixed_abs, tag = 'smem constant byte address 0x4 - core index']
  #allocation1 [shape = 'u32[144,128]{1,0:T(1,128)}', space=vmem, size = 0x12000, scoped, tag = 'internal scratch']
  %s0 = inlined_call_operand.vmem [shape: f32[8,512], index: 0, kind: input, shape index: {}]
  %s1 = inlined_call_operand.vmem [shape: bf16[8,72], index: 1, kind: input, shape index: {}]
  %s2 = inlined_call_operand.vmem [shape: bf16[8,72], index: 2, kind: input, shape index: {}]
  %s3 = inlined_call_operand.vmem [shape: bf16[8,72], index: 3, kind: input, shape index: {}]
  %s4 = inlined_call_operand.vmem [shape: f32[8,512], index: 4, kind: input, shape index: {}]
  %s5 = inlined_call_operand.vmem [shape: f32[8,512], index: 5, kind: input, shape index: {}]
  %s6 = inlined_call_operand.vmem [shape: bf16[8,72], index: 6, kind: input, shape index: {}]
  %s7 = inlined_call_operand.vmem [shape: bf16[8,72], index: 7, kind: input, shape index: {}]
  %s8 = inlined_call_operand.vmem [shape: f32[8,512], index: 8, kind: input, shape index: {}]
  %s9 = inlined_call_operand.vmem [shape: f32[8,512], index: 9, kind: input, shape index: {}]
  %s10 = inlined_call_operand.vmem [shape: bf16[5,200], index: 10, kind: input, shape index: {}]
  %s11 = inlined_call_operand.vmem [shape: f32[5,1], index: 11, kind: input, shape index: {}]
  %s12 = inlined_call_operand.vmem [shape: f32[5,1], index: 12, kind: input, shape index: {}]
  %s13 = inlined_call_operand.vmem [shape: f32[5,512], index: 13, kind: input, shape index: {}]
  %s14 = inlined_call_operand.vmem [shape: f32[2,512], index: 14, kind: input, shape index: {}]
  %s15 = inlined_call_operand.hbm [shape: f32[2,5], index: 15, kind: output, shape index: {}]
  %s16 = sld [smem:[#allocation0]]
  $region70: #{retinotopic_forward.1} parent=0
    _
  %s18 = ssub.s32 1, %s16
  %s19 = scalar_select 0, %s18, %s16
  $region1: #{retinotopic_forward.1} parent=0
    #allocation2 [shape = 'u8[1024]{0}', space=vmem, size = 0x400, scoped, tag = 'output window, operand 0, single buffered']
    #allocation3 [shape = 's32[1]{0}', space=sflag, size = 0x4, scoped, tag = 'scoped memory for retinotopic_forward.1']
    %20 = vsyncpa [#allocation3], 0
    // Predicated region
    $region2: #{retinotopic_forward.1} parent=1 // pred_check
      _
    $region3: #{retinotopic_forward.1} parent=1 // pred_check_branch
      %22 = sbr.rel (0) target = $region5
    $region4: #{retinotopic_forward.1} parent=1 // pred_region
      _
    $region5: #{retinotopic_forward.1} parent=1 // pred_fallthru
      _
    // Predicated region
    $region6: #{retinotopic_forward.1} parent=1 // pred_check
      _
    $region7: #{retinotopic_forward.1} parent=1 // pred_check_branch
      %24 = sbr.rel (0) target = $region9
    $region8: #{retinotopic_forward.1} parent=1 // pred_region
      _
    $region9: #{retinotopic_forward.1} parent=1 // pred_fallthru
      _
    // Predicated region
    $region10: #{retinotopic_forward.1} parent=1 // pred_check
      _
    $region11: #{retinotopic_forward.1} parent=1 // pred_check_branch
      %26 = sbr.rel (0) target = $region13
    $region12: #{retinotopic_forward.1} parent=1 // pred_region
      _
    $region13: #{retinotopic_forward.1} parent=1 // pred_fallthru
      _
    // Predicated region
    $region14: #{retinotopic_forward.1} parent=1 // pred_check
      _
    $region15: #{retinotopic_forward.1} parent=1 // pred_check_branch
      %28 = sbr.rel (0) target = $region17
    $region16: #{retinotopic_forward.1} parent=1 // pred_region
      _
    $region17: #{retinotopic_forward.1} parent=1 // pred_fallthru
      _
    // Predicated region
    $region18: #{retinotopic_forward.1} parent=1 // pred_check
      _
    $region19: #{retinotopic_forward.1} parent=1 // pred_check_branch
      %30 = sbr.rel (0) target = $region21
    $region20: #{retinotopic_forward.1} parent=1 // pred_region
      _
    $region21: #{retinotopic_forward.1} parent=1 // pred_fallthru
      _
    // Predicated region
    $region22: #{retinotopic_forward.1} parent=1 // pred_check
      _
    $region23: #{retinotopic_forward.1} parent=1 // pred_check_branch
      %32 = sbr.rel (0) target = $region25
    $region24: #{retinotopic_forward.1} parent=1 // pred_region
      _
    $region25: #{retinotopic_forward.1} parent=1 // pred_fallthru
      _
    // Predicated region
    $region26: #{retinotopic_forward.1} parent=1 // pred_check
      _
    $region27: #{retinotopic_forward.1} parent=1 // pred_check_branch
      %34 = sbr.rel (0) target = $region29
    $region28: #{retinotopic_forward.1} parent=1 // pred_region
      _
    $region29: #{retinotopic_forward.1} parent=1 // pred_fallthru
      _
    // Predicated region
    $region30: #{retinotopic_forward.1} parent=1 // pred_check
      _
    $region31: #{retinotopic_forward.1} parent=1 // pred_check_branch
      %36 = sbr.rel (0) target = $region33
    $region32: #{retinotopic_forward.1} parent=1 // pred_region
      _
    $region33: #{retinotopic_forward.1} parent=1 // pred_fallthru
      _
    // Predicated region
    $region34: #{retinotopic_forward.1} parent=1 // pred_check
      _
    $region35: #{retinotopic_forward.1} parent=1 // pred_check_branch
      %38 = sbr.rel (0) target = $region37
    $region36: #{retinotopic_forward.1} parent=1 // pred_region
      _
    $region37: #{retinotopic_forward.1} parent=1 // pred_fallthru
      _
    // Predicated region
    $region38: #{retinotopic_forward.1} parent=1 // pred_check
      _
    $region39: #{retinotopic_forward.1} parent=1 // pred_check_branch
      %40 = sbr.rel (0) target = $region41
    $region40: #{retinotopic_forward.1} parent=1 // pred_region
      _
    $region41: #{retinotopic_forward.1} parent=1 // pred_fallthru
      _
    // Predicated region
    $region42: #{retinotopic_forward.1} parent=1 // pred_check
      _
    $region43: #{retinotopic_forward.1} parent=1 // pred_check_branch
      %42 = sbr.rel (0) target = $region45
    $region44: #{retinotopic_forward.1} parent=1 // pred_region
      _
    $region45: #{retinotopic_forward.1} parent=1 // pred_fallthru
      _
    // Predicated region
    $region46: #{retinotopic_forward.1} parent=1 // pred_check
      _
    $region47: #{retinotopic_forward.1} parent=1 // pred_check_branch
      %44 = sbr.rel (0) target = $region49
    $region48: #{retinotopic_forward.1} parent=1 // pred_region
      _
    $region49: #{retinotopic_forward.1} parent=1 // pred_fallthru
      _
    // Predicated region
    $region50: #{retinotopic_forward.1} parent=1 // pred_check
      _
    $region51: #{retinotopic_forward.1} parent=1 // pred_check_branch
      %46 = sbr.rel (0) target = $region53
    $region52: #{retinotopic_forward.1} parent=1 // pred_region
      _
    $region53: #{retinotopic_forward.1} parent=1 // pred_fallthru
      _
    // Predicated region
    $region54: #{retinotopic_forward.1} parent=1 // pred_check
      _
    $region55: #{retinotopic_forward.1} parent=1 // pred_check_branch
      %48 = sbr.rel (0) target = $region57
    $region56: #{retinotopic_forward.1} parent=1 // pred_region
      _
    $region57: #{retinotopic_forward.1} parent=1 // pred_fallthru
      _
    // Predicated region
    $region58: #{retinotopic_forward.1} parent=1 // pred_check
      _
    $region59: #{retinotopic_forward.1} parent=1 // pred_check_branch
      %50 = sbr.rel (0) target = $region61
    $region60: #{retinotopic_forward.1} parent=1 // pred_region
      _
    $region61: #{retinotopic_forward.1} parent=1 // pred_fallthru
      _
    %v52 = vld [vmem:[%s0] sm:$0xff]
    %v53 = vld [vmem:[%s0 + $0x8] sm:$0xff]
    %v54 = vld [vmem:[%s0 + $0x10] sm:$0xff]
    %v55 = vld [vmem:[%s0 + $0x18] sm:$0xff]
    %v56 = vld [vmem:[%s4] sm:$0xff]
    %v57 = vld [vmem:[%s4 + $0x8] sm:$0xff]
    %v58 = vld [vmem:[%s4 + $0x10] sm:$0xff]
    %v59 = vld [vmem:[%s4 + $0x18] sm:$0xff]
    %v60 = vld [vmem:[%s5] sm:$0xff]
    %v61 = vld [vmem:[%s5 + $0x8] sm:$0xff]
    %v62 = vld [vmem:[%s5 + $0x10] sm:$0xff]
    %v63 = vld [vmem:[%s5 + $0x18] sm:$0xff]
    %64 = vrot.lane.b32.xlu0 %v52, 127
    %v65 = vpop.permute.xlu0 %64
    %66 = vrot.lane.b32.xlu0 %v53, 127
    %v67 = vpop.permute.xlu0 %66
    %68 = vrot.lane.b32.xlu0 %v54, 127
    %v69 = vpop.permute.xlu0 %68
    %70 = vrot.lane.b32.xlu0 %v55, 127
    %v71 = vpop.permute.xlu0 %70
    %v72 = vlaneseq
    %v73 = vand.u32 %v72, 127
    %vm74 = vcmp.lt.s32.totalorder %v73, 127
    %v75 = vsel %vm74, %v69, %v71
    %v76 = vsel %vm74, %v67, %v69
    %v77 = vsel %vm74, %v65, %v67
    %v78 = vsel %vm74, %v71, %v65
    %79 = vrot.lane.b32.xlu0 %v52, 126
    %v80 = vpop.permute.xlu0 %79
    %81 = vrot.lane.b32.xlu0 %v53, 126
    %v82 = vpop.permute.xlu0 %81
    %83 = vrot.lane.b32.xlu0 %v54, 126
    %v84 = vpop.permute.xlu0 %83
    %85 = vrot.lane.b32.xlu0 %v55, 126
    %v86 = vpop.permute.xlu0 %85
    %vm87 = vcmp.lt.s32.totalorder %v73, 126
    %v88 = vsel %vm87, %v84, %v86
    %v89 = vsel %vm87, %v82, %v84
    %v90 = vsel %vm87, %v80, %v82
    %v91 = vsel %vm87, %v86, %v80
    %92 = vrot.lane.b32.xlu0 %v52, 112
    %v93 = vpop.permute.xlu0 %92
    %94 = vrot.lane.b32.xlu0 %v53, 112
    %v95 = vpop.permute.xlu0 %94
    %96 = vrot.lane.b32.xlu0 %v54, 112
    %v97 = vpop.permute.xlu0 %96
    %98 = vrot.lane.b32.xlu0 %v55, 112
    %v99 = vpop.permute.xlu0 %98
    %vm100 = vcmp.lt.s32.totalorder %v73, 112
    %v101 = vsel %vm100, %v97, %v99
    %v102 = vsel %vm100, %v95, %v97
    %v103 = vsel %vm100, %v93, %v95
    %v104 = vsel %vm100, %v99, %v93
    %105 = vrot.lane.b32.xlu0 %v52, 111
    %v106 = vpop.permute.xlu0 %105
    %107 = vrot.lane.b32.xlu0 %v53, 111
    %v108 = vpop.permute.xlu0 %107
    %109 = vrot.lane.b32.xlu0 %v54, 111
    %v110 = vpop.permute.xlu0 %109
    %111 = vrot.lane.b32.xlu0 %v55, 111
    %v112 = vpop.permute.xlu0 %111
    %vm113 = vcmp.lt.s32.totalorder %v73, 111
    %v114 = vsel %vm113, %v110, %v112
    %v115 = vsel %vm113, %v108, %v110
    %v116 = vsel %vm113, %v106, %v108
    %v117 = vsel %vm113, %v112, %v106
    %118 = vrot.lane.b32.xlu0 %v52, 110
    %v119 = vpop.permute.xlu0 %118
    %120 = vrot.lane.b32.xlu0 %v53, 110
    %v121 = vpop.permute.xlu0 %120
    %122 = vrot.lane.b32.xlu0 %v54, 110
    %v123 = vpop.permute.xlu0 %122
    %124 = vrot.lane.b32.xlu0 %v55, 110
    %v125 = vpop.permute.xlu0 %124
    %vm126 = vcmp.lt.s32.totalorder %v73, 110
    %v127 = vsel %vm126, %v123, %v125
    %v128 = vsel %vm126, %v121, %v123
    %v129 = vsel %vm126, %v119, %v121
    %v130 = vsel %vm126, %v125, %v119
    %131 = vrot.lane.b32.xlu0 %v52, 96
    %v132 = vpop.permute.xlu0 %131
    %133 = vrot.lane.b32.xlu0 %v53, 96
    %v134 = vpop.permute.xlu0 %133
    %135 = vrot.lane.b32.xlu0 %v54, 96
    %v136 = vpop.permute.xlu0 %135
    %137 = vrot.lane.b32.xlu0 %v55, 96
    %v138 = vpop.permute.xlu0 %137
    %vm139 = vcmp.lt.s32.totalorder %v73, 96
    %v140 = vsel %vm139, %v136, %v138
    %v141 = vsel %vm139, %v134, %v136
    %v142 = vsel %vm139, %v132, %v134
    %v143 = vsel %vm139, %v138, %v132
    %144 = vrot.lane.b32.xlu0 %v52, 95
    %v145 = vpop.permute.xlu0 %144
    %146 = vrot.lane.b32.xlu0 %v53, 95
    %v147 = vpop.permute.xlu0 %146
    %148 = vrot.lane.b32.xlu0 %v54, 95
    %v149 = vpop.permute.xlu0 %148
    %150 = vrot.lane.b32.xlu0 %v55, 95
    %v151 = vpop.permute.xlu0 %150
    %vm152 = vcmp.lt.s32.totalorder %v73, 95
    %v153 = vsel %vm152, %v149, %v151
    %v154 = vsel %vm152, %v147, %v149
    %v155 = vsel %vm152, %v145, %v147
    %v156 = vsel %vm152, %v151, %v145
    %157 = vrot.lane.b32.xlu0 %v52, 94
    %v158 = vpop.permute.xlu0 %157
    %159 = vrot.lane.b32.xlu0 %v53, 94
    %v160 = vpop.permute.xlu0 %159
    %161 = vrot.lane.b32.xlu0 %v54, 94
    %v162 = vpop.permute.xlu0 %161
    %163 = vrot.lane.b32.xlu0 %v55, 94
    %v164 = vpop.permute.xlu0 %163
    %vm165 = vcmp.lt.s32.totalorder %v73, 94
    %v166 = vsel %vm165, %v162, %v164
    %v167 = vsel %vm165, %v160, %v162
    %v168 = vsel %vm165, %v158, %v160
    %v169 = vsel %vm165, %v164, %v158
    %v170 = vpack.c.bf16 %v77, %v52
    %v171 = vpack.c.bf16 %v76, %v53
    %v172 = vpack.c.bf16 %v75, %v54
    %v173 = vpack.c.bf16 %v78, %v55
    %v174 = vpack.c.bf16 %v103, %v90
    %v175 = vpack.c.bf16 %v102, %v89
    %v176 = vpack.c.bf16 %v101, %v88
    %v177 = vpack.c.bf16 %v104, %v91
    %v178 = vpack.c.bf16 %v129, %v116
    %v179 = vpack.c.bf16 %v128, %v115
    %v180 = vpack.c.bf16 %v127, %v114
    %v181 = vpack.c.bf16 %v130, %v117
    %v182 = vpack.c.bf16 %v155, %v142
    %v183 = vpack.c.bf16 %v154, %v141
    %v184 = vpack.c.bf16 %v153, %v140
    %v185 = vpack.c.bf16 %v156, %v143
    %v186 = vpack.c.bf16 %v168, %v168
    %v187 = vpack.c.bf16 %v167, %v167
    %v188 = vpack.c.bf16 %v166, %v166
    %v189 = vpack.c.bf16 %v169, %v169
    %v190 = vld [vmem:[%s1] sm:$0xf]
    %vm191 = vcmask 588800
    %v193 = vsel %vm191, %v190, 0
    %vm195 = vcmask 1043456
    %v197 = vsel %vm195, %v186, 0
    %v200 = vsel %vm195, %v187, 0
    %v203 = vsel %vm195, %v188, 0
    %v206 = vsel %vm195, %v189, 0
    %208 = vmatprep.subr.bf16.mxu0 0
    %209 = vmatpush1.bf16.msra.mxu0 0
    %210 = vmatprep.subr.bf16.mxu0 0
    %211 = vmatpush1.bf16.msra.mxu0 0
    %212 = vmatprep.subr.bf16.mxu0 0
    %213 = vmatpush1.bf16.msra.mxu0 0
    %214 = vmatprep.subr.bf16.mxu0 %v200
    %215 = vmatpush1.bf16.msra.mxu0 %v197
    %216 = vmatprep.subr.bf16.mxu0 %v183
    %217 = vmatpush1.bf16.msra.mxu0 %v182
    %218 = vmatprep.subr.bf16.mxu0 %v179
    %219 = vmatpush1.bf16.msra.mxu0 %v178
    %220 = vmatprep.subr.bf16.mxu0 %v175
    %221 = vmatpush1.bf16.msra.mxu0 %v174
    %222 = vmatprep.subr.bf16.mxu0 %v171
    %223 = vmatpush1.bf16.msra.mxu0 %v170
    %224 = vmatprep.subr.bf16.mxu0 0
    %225 = vmatpush2.bf16.msra.mxu0 0
    %226 = vmatprep.subr.bf16.mxu0 0
    %227 = vmatpush2.bf16.msra.mxu0 0
    %228 = vmatprep.subr.bf16.mxu0 0
    %229 = vmatpush2.bf16.msra.mxu0 0
    %230 = vmatprep.subr.bf16.mxu0 0
    %231 = vmatpush2.bf16.msra.mxu0 0
    %232 = vmatprep.subr.bf16.mxu0 0
    %233 = vmatpush2.bf16.msra.mxu0 0
    %234 = vmatprep.subr.bf16.mxu0 0
    %235 = vmatpush2.bf16.msra.mxu0 0
    %236 = vmatprep.subr.bf16.mxu0 0
    %237 = vmatpush2.bf16.msra.mxu0 0
    %238 = vmatprep.subr.bf16.mxu0 0
    %239 = vmatpush2.bf16.msra.mxu0 0
    %240 = vmatprep.mubr.bf16.mxu0 0
    %241 = vmatmul.mubr.bf16.gmra.mxu0 %v193
    %v242 = vpop.f32.mrf.mxu0
    %v243 = vadd.f32 0.0, %v242
    %v244 = vpop.f32.mrf.mxu0
    %v245 = vadd.f32 0.0, %v244
    %v246 = vpop.f32.mrf.mxu0
    %v247 = vpop.f32.mrf.mxu0
    %248 = vdwg.mxu0
    %249 = vmatprep.subr.bf16.mxu0 0
    %250 = vmatpush1.bf16.msra.mxu0 0
    %251 = vmatprep.subr.bf16.mxu0 0
    %252 = vmatpush1.bf16.msra.mxu0 0
    %253 = vmatprep.subr.bf16.mxu0 0
    %254 = vmatpush1.bf16.msra.mxu0 0
    %255 = vmatprep.subr.bf16.mxu0 %v206
    %256 = vmatpush1.bf16.msra.mxu0 %v203
    %257 = vmatprep.subr.bf16.mxu0 %v185
    %258 = vmatpush1.bf16.msra.mxu0 %v184
    %259 = vmatprep.subr.bf16.mxu0 %v181
    %260 = vmatpush1.bf16.msra.mxu0 %v180
    %261 = vmatprep.subr.bf16.mxu0 %v177
    %262 = vmatpush1.bf16.msra.mxu0 %v176
    %263 = vmatprep.subr.bf16.mxu0 %v173
    %264 = vmatpush1.bf16.msra.mxu0 %v172
    %265 = vmatprep.subr.bf16.mxu0 0
    %266 = vmatpush2.bf16.msra.mxu0 0
    %267 = vmatprep.subr.bf16.mxu0 0
    %268 = vmatpush2.bf16.msra.mxu0 0
    %269 = vmatprep.subr.bf16.mxu0 0
    %270 = vmatpush2.bf16.msra.mxu0 0
    %271 = vmatprep.subr.bf16.mxu0 0
    %272 = vmatpush2.bf16.msra.mxu0 0
    %273 = vmatprep.subr.bf16.mxu0 0
    %274 = vmatpush2.bf16.msra.mxu0 0
    %275 = vmatprep.subr.bf16.mxu0 0
    %276 = vmatpush2.bf16.msra.mxu0 0
    %277 = vmatprep.subr.bf16.mxu0 0
    %278 = vmatpush2.bf16.msra.mxu0 0
    %279 = vmatprep.subr.bf16.mxu0 0
    %280 = vmatpush2.bf16.msra.mxu0 0
    %281 = vmatprep.mubr.bf16.mxu0 0
    %282 = vmatmul.mubr.bf16.gmra.mxu0 %v193
    %v283 = vpop.f32.mrf.mxu0
    %v284 = vadd.f32 0.0, %v283
    %v285 = vpop.f32.mrf.mxu0
    %v286 = vadd.f32 0.0, %v285
    %v287 = vpop.f32.mrf.mxu0
    %v288 = vpop.f32.mrf.mxu0
    %289 = vdwg.mxu0
    %290 = vrot.lane.b32.xlu0 %v243, 127
    %v291 = vpop.permute.xlu0 %290
    %292 = vrot.lane.b32.xlu0 %v245, 127
    %v293 = vpop.permute.xlu0 %292
    %294 = vrot.lane.b32.xlu0 %v284, 127
    %v295 = vpop.permute.xlu0 %294
    %296 = vrot.lane.b32.xlu0 %v286, 127
    %v297 = vpop.permute.xlu0 %296
    %v298 = vsel %vm74, %v295, %v297
    %v299 = vsel %vm74, %v293, %v295
    %v300 = vsel %vm74, %v291, %v293
    %v301 = vsel %vm74, %v297, %v291
    %302 = vrot.lane.b32.xlu0 %v243, 126
    %v303 = vpop.permute.xlu0 %302
    %304 = vrot.lane.b32.xlu0 %v245, 126
    %v305 = vpop.permute.xlu0 %304
    %306 = vrot.lane.b32.xlu0 %v284, 126
    %v307 = vpop.permute.xlu0 %306
    %308 = vrot.lane.b32.xlu0 %v286, 126
    %v309 = vpop.permute.xlu0 %308
    %v310 = vsel %vm87, %v307, %v309
    %v311 = vsel %vm87, %v305, %v307
    %v312 = vsel %vm87, %v303, %v305
    %v313 = vsel %vm87, %v309, %v303
    %314 = vrot.lane.b32.xlu0 %v243, 112
    %v315 = vpop.permute.xlu0 %314
    %316 = vrot.lane.b32.xlu0 %v245, 112
    %v317 = vpop.permute.xlu0 %316
    %318 = vrot.lane.b32.xlu0 %v284, 112
    %v319 = vpop.permute.xlu0 %318
    %320 = vrot.lane.b32.xlu0 %v286, 112
    %v321 = vpop.permute.xlu0 %320
    %v322 = vsel %vm100, %v319, %v321
    %v323 = vsel %vm100, %v317, %v319
    %v324 = vsel %vm100, %v315, %v317
    %v325 = vsel %vm100, %v321, %v315
    %326 = vrot.lane.b32.xlu0 %v243, 111
    %v327 = vpop.permute.xlu0 %326
    %328 = vrot.lane.b32.xlu0 %v245, 111
    %v329 = vpop.permute.xlu0 %328
    %330 = vrot.lane.b32.xlu0 %v284, 111
    %v331 = vpop.permute.xlu0 %330
    %332 = vrot.lane.b32.xlu0 %v286, 111
    %v333 = vpop.permute.xlu0 %332
    %v334 = vsel %vm113, %v331, %v333
    %v335 = vsel %vm113, %v329, %v331
    %v336 = vsel %vm113, %v327, %v329
    %v337 = vsel %vm113, %v333, %v327
    %338 = vrot.lane.b32.xlu0 %v243, 110
    %v339 = vpop.permute.xlu0 %338
    %340 = vrot.lane.b32.xlu0 %v245, 110
    %v341 = vpop.permute.xlu0 %340
    %342 = vrot.lane.b32.xlu0 %v284, 110
    %v343 = vpop.permute.xlu0 %342
    %344 = vrot.lane.b32.xlu0 %v286, 110
    %v345 = vpop.permute.xlu0 %344
    %v346 = vsel %vm126, %v343, %v345
    %v347 = vsel %vm126, %v341, %v343
    %v348 = vsel %vm126, %v339, %v341
    %v349 = vsel %vm126, %v345, %v339
    %350 = vrot.lane.b32.xlu0 %v243, 96
    %v351 = vpop.permute.xlu0 %350
    %352 = vrot.lane.b32.xlu0 %v245, 96
    %v353 = vpop.permute.xlu0 %352
    %354 = vrot.lane.b32.xlu0 %v284, 96
    %v355 = vpop.permute.xlu0 %354
    %356 = vrot.lane.b32.xlu0 %v286, 96
    %v357 = vpop.permute.xlu0 %356
    %v358 = vsel %vm139, %v355, %v357
    %v359 = vsel %vm139, %v353, %v355
    %v360 = vsel %vm139, %v351, %v353
    %v361 = vsel %vm139, %v357, %v351
    %362 = vrot.lane.b32.xlu0 %v243, 95
    %v363 = vpop.permute.xlu0 %362
    %364 = vrot.lane.b32.xlu0 %v245, 95
    %v365 = vpop.permute.xlu0 %364
    %366 = vrot.lane.b32.xlu0 %v284, 95
    %v367 = vpop.permute.xlu0 %366
    %368 = vrot.lane.b32.xlu0 %v286, 95
    %v369 = vpop.permute.xlu0 %368
    %v370 = vsel %vm152, %v367, %v369
    %v371 = vsel %vm152, %v365, %v367
    %v372 = vsel %vm152, %v363, %v365
    %v373 = vsel %vm152, %v369, %v363
    %374 = vrot.lane.b32.xlu0 %v243, 94
    %v375 = vpop.permute.xlu0 %374
    %376 = vrot.lane.b32.xlu0 %v245, 94
    %v377 = vpop.permute.xlu0 %376
    %378 = vrot.lane.b32.xlu0 %v284, 94
    %v379 = vpop.permute.xlu0 %378
    %380 = vrot.lane.b32.xlu0 %v286, 94
    %v381 = vpop.permute.xlu0 %380
    %v382 = vsel %vm165, %v379, %v381
    %v383 = vsel %vm165, %v377, %v379
    %v384 = vsel %vm165, %v375, %v377
    %v385 = vsel %vm165, %v381, %v375
    %v386 = vpack.c.bf16 %v300, %v243
    %v387 = vpack.c.bf16 %v299, %v245
    %v388 = vpack.c.bf16 %v298, %v284
    %v389 = vpack.c.bf16 %v301, %v286
    %v390 = vpack.c.bf16 %v324, %v312
    %v391 = vpack.c.bf16 %v323, %v311
    %v392 = vpack.c.bf16 %v322, %v310
    %v393 = vpack.c.bf16 %v325, %v313
    %v394 = vpack.c.bf16 %v348, %v336
    %v395 = vpack.c.bf16 %v347, %v335
    %v396 = vpack.c.bf16 %v346, %v334
    %v397 = vpack.c.bf16 %v349, %v337
    %v398 = vpack.c.bf16 %v372, %v360
    %v399 = vpack.c.bf16 %v371, %v359
    %v400 = vpack.c.bf16 %v370, %v358
    %v401 = vpack.c.bf16 %v373, %v361
    %v402 = vpack.c.bf16 %v384, %v384
    %v403 = vpack.c.bf16 %v383, %v383
    %v404 = vpack.c.bf16 %v382, %v382
    %v405 = vpack.c.bf16 %v385, %v385
    %v406 = vld [vmem:[%s2] sm:$0xf]
    %v408 = vsel %vm191, %v406, 0
    %v411 = vsel %vm195, %v402, 0
    %v414 = vsel %vm195, %v403, 0
    %v417 = vsel %vm195, %v404, 0
    %v420 = vsel %vm195, %v405, 0
    %422 = vmatprep.subr.bf16.mxu0 0
    %423 = vmatpush1.bf16.msra.mxu0 0
    %424 = vmatprep.subr.bf16.mxu0 0
    %425 = vmatpush1.bf16.msra.mxu0 0
    %426 = vmatprep.subr.bf16.mxu0 0
    %427 = vmatpush1.bf16.msra.mxu0 0
    %428 = vmatprep.subr.bf16.mxu0 %v414
    %429 = vmatpush1.bf16.msra.mxu0 %v411
    %430 = vmatprep.subr.bf16.mxu0 %v399
    %431 = vmatpush1.bf16.msra.mxu0 %v398
    %432 = vmatprep.subr.bf16.mxu0 %v395
    %433 = vmatpush1.bf16.msra.mxu0 %v394
    %434 = vmatprep.subr.bf16.mxu0 %v391
    %435 = vmatpush1.bf16.msra.mxu0 %v390
    %436 = vmatprep.subr.bf16.mxu0 %v387
    %437 = vmatpush1.bf16.msra.mxu0 %v386
    %438 = vmatprep.subr.bf16.mxu0 0
    %439 = vmatpush2.bf16.msra.mxu0 0
    %440 = vmatprep.subr.bf16.mxu0 0
    %441 = vmatpush2.bf16.msra.mxu0 0
    %442 = vmatprep.subr.bf16.mxu0 0
    %443 = vmatpush2.bf16.msra.mxu0 0
    %444 = vmatprep.subr.bf16.mxu0 0
    %445 = vmatpush2.bf16.msra.mxu0 0
    %446 = vmatprep.subr.bf16.mxu0 0
    %447 = vmatpush2.bf16.msra.mxu0 0
    %448 = vmatprep.subr.bf16.mxu0 0
    %449 = vmatpush2.bf16.msra.mxu0 0
    %450 = vmatprep.subr.bf16.mxu0 0
    %451 = vmatpush2.bf16.msra.mxu0 0
    %452 = vmatprep.subr.bf16.mxu0 0
    %453 = vmatpush2.bf16.msra.mxu0 0
    %454 = vmatprep.mubr.bf16.mxu0 0
    %455 = vmatmul.mubr.bf16.gmra.mxu0 %v408
    %v456 = vpop.f32.mrf.mxu0
    %v457 = vadd.f32 0.0, %v456
    %v458 = vpop.f32.mrf.mxu0
    %v459 = vadd.f32 0.0, %v458
    %v460 = vpop.f32.mrf.mxu0
    %v461 = vpop.f32.mrf.mxu0
    %462 = vdwg.mxu0
    %463 = vmatprep.subr.bf16.mxu0 0
    %464 = vmatpush1.bf16.msra.mxu0 0
    %465 = vmatprep.subr.bf16.mxu0 0
    %466 = vmatpush1.bf16.msra.mxu0 0
    %467 = vmatprep.subr.bf16.mxu0 0
    %468 = vmatpush1.bf16.msra.mxu0 0
    %469 = vmatprep.subr.bf16.mxu0 %v420
    %470 = vmatpush1.bf16.msra.mxu0 %v417
    %471 = vmatprep.subr.bf16.mxu0 %v401
    %472 = vmatpush1.bf16.msra.mxu0 %v400
    %473 = vmatprep.subr.bf16.mxu0 %v397
    %474 = vmatpush1.bf16.msra.mxu0 %v396
    %475 = vmatprep.subr.bf16.mxu0 %v393
    %476 = vmatpush1.bf16.msra.mxu0 %v392
    %477 = vmatprep.subr.bf16.mxu0 %v389
    %478 = vmatpush1.bf16.msra.mxu0 %v388
    %479 = vmatprep.subr.bf16.mxu0 0
    %480 = vmatpush2.bf16.msra.mxu0 0
    %481 = vmatprep.subr.bf16.mxu0 0
    %482 = vmatpush2.bf16.msra.mxu0 0
    %483 = vmatprep.subr.bf16.mxu0 0
    %484 = vmatpush2.bf16.msra.mxu0 0
    %485 = vmatprep.subr.bf16.mxu0 0
    %486 = vmatpush2.bf16.msra.mxu0 0
    %487 = vmatprep.subr.bf16.mxu0 0
    %488 = vmatpush2.bf16.msra.mxu0 0
    %489 = vmatprep.subr.bf16.mxu0 0
    %490 = vmatpush2.bf16.msra.mxu0 0
    %491 = vmatprep.subr.bf16.mxu0 0
    %492 = vmatpush2.bf16.msra.mxu0 0
    %493 = vmatprep.subr.bf16.mxu0 0
    %494 = vmatpush2.bf16.msra.mxu0 0
    %495 = vmatprep.mubr.bf16.mxu0 0
    %496 = vmatmul.mubr.bf16.gmra.mxu0 %v408
    %v497 = vpop.f32.mrf.mxu0
    %v498 = vadd.f32 0.0, %v497
    %v499 = vpop.f32.mrf.mxu0
    %v500 = vadd.f32 0.0, %v499
    %v501 = vpop.f32.mrf.mxu0
    %v502 = vpop.f32.mrf.mxu0
    %503 = vdwg.mxu0
    %504 = vrot.lane.b32.xlu0 %v457, 127
    %v505 = vpop.permute.xlu0 %504
    %506 = vrot.lane.b32.xlu0 %v459, 127
    %v507 = vpop.permute.xlu0 %506
    %508 = vrot.lane.b32.xlu0 %v498, 127
    %v509 = vpop.permute.xlu0 %508
    %510 = vrot.lane.b32.xlu0 %v500, 127
    %v511 = vpop.permute.xlu0 %510
    %v512 = vsel %vm74, %v509, %v511
    %v513 = vsel %vm74, %v507, %v509
    %v514 = vsel %vm74, %v505, %v507
    %v515 = vsel %vm74, %v511, %v505
    %516 = vrot.lane.b32.xlu0 %v457, 126
    %v517 = vpop.permute.xlu0 %516
    %518 = vrot.lane.b32.xlu0 %v459, 126
    %v519 = vpop.permute.xlu0 %518
    %520 = vrot.lane.b32.xlu0 %v498, 126
    %v521 = vpop.permute.xlu0 %520
    %522 = vrot.lane.b32.xlu0 %v500, 126
    %v523 = vpop.permute.xlu0 %522
    %v524 = vsel %vm87, %v521, %v523
    %v525 = vsel %vm87, %v519, %v521
    %v526 = vsel %vm87, %v517, %v519
    %v527 = vsel %vm87, %v523, %v517
    %528 = vrot.lane.b32.xlu0 %v457, 112
    %v529 = vpop.permute.xlu0 %528
    %530 = vrot.lane.b32.xlu0 %v459, 112
    %v531 = vpop.permute.xlu0 %530
    %532 = vrot.lane.b32.xlu0 %v498, 112
    %v533 = vpop.permute.xlu0 %532
    %534 = vrot.lane.b32.xlu0 %v500, 112
    %v535 = vpop.permute.xlu0 %534
    %v536 = vsel %vm100, %v533, %v535
    %v537 = vsel %vm100, %v531, %v533
    %v538 = vsel %vm100, %v529, %v531
    %v539 = vsel %vm100, %v535, %v529
    %540 = vrot.lane.b32.xlu0 %v457, 111
    %v541 = vpop.permute.xlu0 %540
    %542 = vrot.lane.b32.xlu0 %v459, 111
    %v543 = vpop.permute.xlu0 %542
    %544 = vrot.lane.b32.xlu0 %v498, 111
    %v545 = vpop.permute.xlu0 %544
    %546 = vrot.lane.b32.xlu0 %v500, 111
    %v547 = vpop.permute.xlu0 %546
    %v548 = vsel %vm113, %v545, %v547
    %v549 = vsel %vm113, %v543, %v545
    %v550 = vsel %vm113, %v541, %v543
    %v551 = vsel %vm113, %v547, %v541
    %552 = vrot.lane.b32.xlu0 %v457, 110
    %v553 = vpop.permute.xlu0 %552
    %554 = vrot.lane.b32.xlu0 %v459, 110
    %v555 = vpop.permute.xlu0 %554
    %556 = vrot.lane.b32.xlu0 %v498, 110
    %v557 = vpop.permute.xlu0 %556
    %558 = vrot.lane.b32.xlu0 %v500, 110
    %v559 = vpop.permute.xlu0 %558
    %v560 = vsel %vm126, %v557, %v559
    %v561 = vsel %vm126, %v555, %v557
    %v562 = vsel %vm126, %v553, %v555
    %v563 = vsel %vm126, %v559, %v553
    %564 = vrot.lane.b32.xlu0 %v457, 96
    %v565 = vpop.permute.xlu0 %564
    %566 = vrot.lane.b32.xlu0 %v459, 96
    %v567 = vpop.permute.xlu0 %566
    %568 = vrot.lane.b32.xlu0 %v498, 96
    %v569 = vpop.permute.xlu0 %568
    %570 = vrot.lane.b32.xlu0 %v500, 96
    %v571 = vpop.permute.xlu0 %570
    %v572 = vsel %vm139, %v569, %v571
    %v573 = vsel %vm139, %v567, %v569
    %v574 = vsel %vm139, %v565, %v567
    %v575 = vsel %vm139, %v571, %v565
    %576 = vrot.lane.b32.xlu0 %v457, 95
    %v577 = vpop.permute.xlu0 %576
    %578 = vrot.lane.b32.xlu0 %v459, 95
    %v579 = vpop.permute.xlu0 %578
    %580 = vrot.lane.b32.xlu0 %v498, 95
    %v581 = vpop.permute.xlu0 %580
    %582 = vrot.lane.b32.xlu0 %v500, 95
    %v583 = vpop.permute.xlu0 %582
    %v584 = vsel %vm152, %v581, %v583
    %v585 = vsel %vm152, %v579, %v581
    %v586 = vsel %vm152, %v577, %v579
    %v587 = vsel %vm152, %v583, %v577
    %588 = vrot.lane.b32.xlu0 %v457, 94
    %v589 = vpop.permute.xlu0 %588
    %590 = vrot.lane.b32.xlu0 %v459, 94
    %v591 = vpop.permute.xlu0 %590
    %592 = vrot.lane.b32.xlu0 %v498, 94
    %v593 = vpop.permute.xlu0 %592
    %594 = vrot.lane.b32.xlu0 %v500, 94
    %v595 = vpop.permute.xlu0 %594
    %v596 = vsel %vm165, %v593, %v595
    %v597 = vsel %vm165, %v591, %v593
    %v598 = vsel %vm165, %v589, %v591
    %v599 = vsel %vm165, %v595, %v589
    %v600 = vpack.c.bf16 %v514, %v457
    %v601 = vpack.c.bf16 %v513, %v459
    %v602 = vpack.c.bf16 %v512, %v498
    %v603 = vpack.c.bf16 %v515, %v500
    %v604 = vpack.c.bf16 %v538, %v526
    %v605 = vpack.c.bf16 %v537, %v525
    %v606 = vpack.c.bf16 %v536, %v524
    %v607 = vpack.c.bf16 %v539, %v527
    %v608 = vpack.c.bf16 %v562, %v550
    %v609 = vpack.c.bf16 %v561, %v549
    %v610 = vpack.c.bf16 %v560, %v548
    %v611 = vpack.c.bf16 %v563, %v551
    %v612 = vpack.c.bf16 %v586, %v574
    %v613 = vpack.c.bf16 %v585, %v573
    %v614 = vpack.c.bf16 %v584, %v572
    %v615 = vpack.c.bf16 %v587, %v575
    %v616 = vpack.c.bf16 %v598, %v598
    %v617 = vpack.c.bf16 %v597, %v597
    %v618 = vpack.c.bf16 %v596, %v596
    %v619 = vpack.c.bf16 %v599, %v599
    %v620 = vld [vmem:[%s3] sm:$0xf]
    %v622 = vsel %vm191, %v620, 0
    %v625 = vsel %vm195, %v616, 0
    %v628 = vsel %vm195, %v617, 0
    %v631 = vsel %vm195, %v618, 0
    %v634 = vsel %vm195, %v619, 0
    %636 = vmatprep.subr.bf16.mxu0 0
    %637 = vmatpush1.bf16.msra.mxu0 0
    %638 = vmatprep.subr.bf16.mxu0 0
    %639 = vmatpush1.bf16.msra.mxu0 0
    %640 = vmatprep.subr.bf16.mxu0 0
    %641 = vmatpush1.bf16.msra.mxu0 0
    %642 = vmatprep.subr.bf16.mxu0 %v628
    %643 = vmatpush1.bf16.msra.mxu0 %v625
    %644 = vmatprep.subr.bf16.mxu0 %v613
    %645 = vmatpush1.bf16.msra.mxu0 %v612
    %646 = vmatprep.subr.bf16.mxu0 %v609
    %647 = vmatpush1.bf16.msra.mxu0 %v608
    %648 = vmatprep.subr.bf16.mxu0 %v605
    %649 = vmatpush1.bf16.msra.mxu0 %v604
    %650 = vmatprep.subr.bf16.mxu0 %v601
    %651 = vmatpush1.bf16.msra.mxu0 %v600
    %652 = vmatprep.subr.bf16.mxu0 0
    %653 = vmatpush2.bf16.msra.mxu0 0
    %654 = vmatprep.subr.bf16.mxu0 0
    %655 = vmatpush2.bf16.msra.mxu0 0
    %656 = vmatprep.subr.bf16.mxu0 0
    %657 = vmatpush2.bf16.msra.mxu0 0
    %658 = vmatprep.subr.bf16.mxu0 0
    %659 = vmatpush2.bf16.msra.mxu0 0
    %660 = vmatprep.subr.bf16.mxu0 0
    %661 = vmatpush2.bf16.msra.mxu0 0
    %662 = vmatprep.subr.bf16.mxu0 0
    %663 = vmatpush2.bf16.msra.mxu0 0
    %664 = vmatprep.subr.bf16.mxu0 0
    %665 = vmatpush2.bf16.msra.mxu0 0
    %666 = vmatprep.subr.bf16.mxu0 0
    %667 = vmatpush2.bf16.msra.mxu0 0
    %668 = vmatprep.mubr.bf16.mxu0 0
    %669 = vmatmul.mubr.bf16.gmra.mxu0 %v622
    %v670 = vpop.f32.mrf.mxu0
    %v671 = vadd.f32 0.0, %v670
    %v672 = vpop.f32.mrf.mxu0
    %v673 = vadd.f32 0.0, %v672
    %v674 = vpop.f32.mrf.mxu0
    %v675 = vpop.f32.mrf.mxu0
    %676 = vdwg.mxu0
    %677 = vmatprep.subr.bf16.mxu0 0
    %678 = vmatpush1.bf16.msra.mxu0 0
    %679 = vmatprep.subr.bf16.mxu0 0
    %680 = vmatpush1.bf16.msra.mxu0 0
    %681 = vmatprep.subr.bf16.mxu0 0
    %682 = vmatpush1.bf16.msra.mxu0 0
    %683 = vmatprep.subr.bf16.mxu0 %v634
    %684 = vmatpush1.bf16.msra.mxu0 %v631
    %685 = vmatprep.subr.bf16.mxu0 %v615
    %686 = vmatpush1.bf16.msra.mxu0 %v614
    %687 = vmatprep.subr.bf16.mxu0 %v611
    %688 = vmatpush1.bf16.msra.mxu0 %v610
    %689 = vmatprep.subr.bf16.mxu0 %v607
    %690 = vmatpush1.bf16.msra.mxu0 %v606
    %691 = vmatprep.subr.bf16.mxu0 %v603
    %692 = vmatpush1.bf16.msra.mxu0 %v602
    %693 = vmatprep.subr.bf16.mxu0 0
    %694 = vmatpush2.bf16.msra.mxu0 0
    %695 = vmatprep.subr.bf16.mxu0 0
    %696 = vmatpush2.bf16.msra.mxu0 0
    %697 = vmatprep.subr.bf16.mxu0 0
    %698 = vmatpush2.bf16.msra.mxu0 0
    %699 = vmatprep.subr.bf16.mxu0 0
    %700 = vmatpush2.bf16.msra.mxu0 0
    %701 = vmatprep.subr.bf16.mxu0 0
    %702 = vmatpush2.bf16.msra.mxu0 0
    %703 = vmatprep.subr.bf16.mxu0 0
    %704 = vmatpush2.bf16.msra.mxu0 0
    %705 = vmatprep.subr.bf16.mxu0 0
    %706 = vmatpush2.bf16.msra.mxu0 0
    %707 = vmatprep.subr.bf16.mxu0 0
    %708 = vmatpush2.bf16.msra.mxu0 0
    %709 = vmatprep.mubr.bf16.mxu0 0
    %710 = vmatmul.mubr.bf16.gmra.mxu0 %v622
    %v711 = vpop.f32.mrf.mxu0
    %v712 = vadd.f32 0.0, %v711
    %v713 = vpop.f32.mrf.mxu0
    %v714 = vadd.f32 0.0, %v713
    %v715 = vpop.f32.mrf.mxu0
    %v716 = vpop.f32.mrf.mxu0
    %717 = vdwg.mxu0
    %v718 = vmul.f32 %v671, %v56
    %v719 = vmul.f32 %v673, %v57
    %v720 = vmul.f32 %v712, %v58
    %v721 = vmul.f32 %v714, %v59
    %v722 = vadd.f32 %v718, %v60
    %v723 = vadd.f32 %v719, %v61
    %v724 = vadd.f32 %v720, %v62
    %v725 = vadd.f32 %v721, %v63
    %v726 = vmax.f32 %v722, 0.0
    %v727 = vmax.f32 %v723, 0.0
    %v728 = vmax.f32 %v724, 0.0
    %v729 = vmax.f32 %v725, 0.0
    %v730 = vld [vmem:[%s8] sm:$0xff]
    %v731 = vld [vmem:[%s8 + $0x8] sm:$0xff]
    %v732 = vld [vmem:[%s8 + $0x10] sm:$0xff]
    %v733 = vld [vmem:[%s8 + $0x18] sm:$0xff]
    %v734 = vld [vmem:[%s9] sm:$0xff]
    %v735 = vld [vmem:[%s9 + $0x8] sm:$0xff]
    %v736 = vld [vmem:[%s9 + $0x10] sm:$0xff]
    %v737 = vld [vmem:[%s9 + $0x18] sm:$0xff]
    %738 = vrot.lane.b32.xlu0 %v726, 127
    %v739 = vpop.permute.xlu0 %738
    %740 = vrot.lane.b32.xlu0 %v727, 127
    %v741 = vpop.permute.xlu0 %740
    %742 = vrot.lane.b32.xlu0 %v728, 127
    %v743 = vpop.permute.xlu0 %742
    %744 = vrot.lane.b32.xlu0 %v729, 127
    %v745 = vpop.permute.xlu0 %744
    %v746 = vsel %vm74, %v743, %v745
    %v747 = vsel %vm74, %v741, %v743
    %v748 = vsel %vm74, %v739, %v741
    %v749 = vsel %vm74, %v745, %v739
    %750 = vrot.lane.b32.xlu0 %v726, 126
    %v751 = vpop.permute.xlu0 %750
    %752 = vrot.lane.b32.xlu0 %v727, 126
    %v753 = vpop.permute.xlu0 %752
    %754 = vrot.lane.b32.xlu0 %v728, 126
    %v755 = vpop.permute.xlu0 %754
    %756 = vrot.lane.b32.xlu0 %v729, 126
    %v757 = vpop.permute.xlu0 %756
    %v758 = vsel %vm87, %v755, %v757
    %v759 = vsel %vm87, %v753, %v755
    %v760 = vsel %vm87, %v751, %v753
    %v761 = vsel %vm87, %v757, %v751
    %762 = vrot.lane.b32.xlu0 %v726, 112
    %v763 = vpop.permute.xlu0 %762
    %764 = vrot.lane.b32.xlu0 %v727, 112
    %v765 = vpop.permute.xlu0 %764
    %766 = vrot.lane.b32.xlu0 %v728, 112
    %v767 = vpop.permute.xlu0 %766
    %768 = vrot.lane.b32.xlu0 %v729, 112
    %v769 = vpop.permute.xlu0 %768
    %v770 = vsel %vm100, %v767, %v769
    %v771 = vsel %vm100, %v765, %v767
    %v772 = vsel %vm100, %v763, %v765
    %v773 = vsel %vm100, %v769, %v763
    %774 = vrot.lane.b32.xlu0 %v726, 111
    %v775 = vpop.permute.xlu0 %774
    %776 = vrot.lane.b32.xlu0 %v727, 111
    %v777 = vpop.permute.xlu0 %776
    %778 = vrot.lane.b32.xlu0 %v728, 111
    %v779 = vpop.permute.xlu0 %778
    %780 = vrot.lane.b32.xlu0 %v729, 111
    %v781 = vpop.permute.xlu0 %780
    %v782 = vsel %vm113, %v779, %v781
    %v783 = vsel %vm113, %v777, %v779
    %v784 = vsel %vm113, %v775, %v777
    %v785 = vsel %vm113, %v781, %v775
    %786 = vrot.lane.b32.xlu0 %v726, 110
    %v787 = vpop.permute.xlu0 %786
    %788 = vrot.lane.b32.xlu0 %v727, 110
    %v789 = vpop.permute.xlu0 %788
    %790 = vrot.lane.b32.xlu0 %v728, 110
    %v791 = vpop.permute.xlu0 %790
    %792 = vrot.lane.b32.xlu0 %v729, 110
    %v793 = vpop.permute.xlu0 %792
    %v794 = vsel %vm126, %v791, %v793
    %v795 = vsel %vm126, %v789, %v791
    %v796 = vsel %vm126, %v787, %v789
    %v797 = vsel %vm126, %v793, %v787
    %798 = vrot.lane.b32.xlu0 %v726, 96
    %v799 = vpop.permute.xlu0 %798
    %800 = vrot.lane.b32.xlu0 %v727, 96
    %v801 = vpop.permute.xlu0 %800
    %802 = vrot.lane.b32.xlu0 %v728, 96
    %v803 = vpop.permute.xlu0 %802
    %804 = vrot.lane.b32.xlu0 %v729, 96
    %v805 = vpop.permute.xlu0 %804
    %v806 = vsel %vm139, %v803, %v805
    %v807 = vsel %vm139, %v801, %v803
    %v808 = vsel %vm139, %v799, %v801
    %v809 = vsel %vm139, %v805, %v799
    %810 = vrot.lane.b32.xlu0 %v726, 95
    %v811 = vpop.permute.xlu0 %810
    %812 = vrot.lane.b32.xlu0 %v727, 95
    %v813 = vpop.permute.xlu0 %812
    %814 = vrot.lane.b32.xlu0 %v728, 95
    %v815 = vpop.permute.xlu0 %814
    %816 = vrot.lane.b32.xlu0 %v729, 95
    %v817 = vpop.permute.xlu0 %816
    %v818 = vsel %vm152, %v815, %v817
    %v819 = vsel %vm152, %v813, %v815
    %v820 = vsel %vm152, %v811, %v813
    %v821 = vsel %vm152, %v817, %v811
    %822 = vrot.lane.b32.xlu0 %v726, 94
    %v823 = vpop.permute.xlu0 %822
    %824 = vrot.lane.b32.xlu0 %v727, 94
    %v825 = vpop.permute.xlu0 %824
    %826 = vrot.lane.b32.xlu0 %v728, 94
    %v827 = vpop.permute.xlu0 %826
    %828 = vrot.lane.b32.xlu0 %v729, 94
    %v829 = vpop.permute.xlu0 %828
    %v830 = vsel %vm165, %v827, %v829
    %v831 = vsel %vm165, %v825, %v827
    %v832 = vsel %vm165, %v823, %v825
    %v833 = vsel %vm165, %v829, %v823
    %v834 = vpack.c.bf16 %v748, %v726
    %v835 = vpack.c.bf16 %v747, %v727
    %v836 = vpack.c.bf16 %v746, %v728
    %v837 = vpack.c.bf16 %v749, %v729
    %v838 = vpack.c.bf16 %v772, %v760
    %v839 = vpack.c.bf16 %v771, %v759
    %v840 = vpack.c.bf16 %v770, %v758
    %v841 = vpack.c.bf16 %v773, %v761
    %v842 = vpack.c.bf16 %v796, %v784
    %v843 = vpack.c.bf16 %v795, %v783
    %v844 = vpack.c.bf16 %v794, %v782
    %v845 = vpack.c.bf16 %v797, %v785
    %v846 = vpack.c.bf16 %v820, %v808
    %v847 = vpack.c.bf16 %v819, %v807
    %v848 = vpack.c.bf16 %v818, %v806
    %v849 = vpack.c.bf16 %v821, %v809
    %v850 = vpack.c.bf16 %v832, %v832
    %v851 = vpack.c.bf16 %v831, %v831
    %v852 = vpack.c.bf16 %v830, %v830
    %v853 = vpack.c.bf16 %v833, %v833
    %v854 = vld [vmem:[%s6] sm:$0xf]
    %v856 = vsel %vm191, %v854, 0
    %v859 = vsel %vm195, %v850, 0
    %v862 = vsel %vm195, %v851, 0
    %v865 = vsel %vm195, %v852, 0
    %v868 = vsel %vm195, %v853, 0
    %870 = vmatprep.subr.bf16.mxu0 0
    %871 = vmatpush1.bf16.msra.mxu0 0
    %872 = vmatprep.subr.bf16.mxu0 0
    %873 = vmatpush1.bf16.msra.mxu0 0
    %874 = vmatprep.subr.bf16.mxu0 0
    %875 = vmatpush1.bf16.msra.mxu0 0
    %876 = vmatprep.subr.bf16.mxu0 %v862
    %877 = vmatpush1.bf16.msra.mxu0 %v859
    %878 = vmatprep.subr.bf16.mxu0 %v847
    %879 = vmatpush1.bf16.msra.mxu0 %v846
    %880 = vmatprep.subr.bf16.mxu0 %v843
    %881 = vmatpush1.bf16.msra.mxu0 %v842
    %882 = vmatprep.subr.bf16.mxu0 %v839
    %883 = vmatpush1.bf16.msra.mxu0 %v838
    %884 = vmatprep.subr.bf16.mxu0 %v835
    %885 = vmatpush1.bf16.msra.mxu0 %v834
    %886 = vmatprep.subr.bf16.mxu0 0
    %887 = vmatpush2.bf16.msra.mxu0 0
    %888 = vmatprep.subr.bf16.mxu0 0
    %889 = vmatpush2.bf16.msra.mxu0 0
    %890 = vmatprep.subr.bf16.mxu0 0
    %891 = vmatpush2.bf16.msra.mxu0 0
    %892 = vmatprep.subr.bf16.mxu0 0
    %893 = vmatpush2.bf16.msra.mxu0 0
    %894 = vmatprep.subr.bf16.mxu0 0
    %895 = vmatpush2.bf16.msra.mxu0 0
    %896 = vmatprep.subr.bf16.mxu0 0
    %897 = vmatpush2.bf16.msra.mxu0 0
    %898 = vmatprep.subr.bf16.mxu0 0
    %899 = vmatpush2.bf16.msra.mxu0 0
    %900 = vmatprep.subr.bf16.mxu0 0
    %901 = vmatpush2.bf16.msra.mxu0 0
    %902 = vmatprep.mubr.bf16.mxu0 0
    %903 = vmatmul.mubr.bf16.gmra.mxu0 %v856
    %v904 = vpop.f32.mrf.mxu0
    %v905 = vadd.f32 0.0, %v904
    %v906 = vpop.f32.mrf.mxu0
    %v907 = vadd.f32 0.0, %v906
    %v908 = vpop.f32.mrf.mxu0
    %v909 = vpop.f32.mrf.mxu0
    %910 = vdwg.mxu0
    %911 = vmatprep.subr.bf16.mxu0 0
    %912 = vmatpush1.bf16.msra.mxu0 0
    %913 = vmatprep.subr.bf16.mxu0 0
    %914 = vmatpush1.bf16.msra.mxu0 0
    %915 = vmatprep.subr.bf16.mxu0 0
    %916 = vmatpush1.bf16.msra.mxu0 0
    %917 = vmatprep.subr.bf16.mxu0 %v868
    %918 = vmatpush1.bf16.msra.mxu0 %v865
    %919 = vmatprep.subr.bf16.mxu0 %v849
    %920 = vmatpush1.bf16.msra.mxu0 %v848
    %921 = vmatprep.subr.bf16.mxu0 %v845
    %922 = vmatpush1.bf16.msra.mxu0 %v844
    %923 = vmatprep.subr.bf16.mxu0 %v841
    %924 = vmatpush1.bf16.msra.mxu0 %v840
    %925 = vmatprep.subr.bf16.mxu0 %v837
    %926 = vmatpush1.bf16.msra.mxu0 %v836
    %927 = vmatprep.subr.bf16.mxu0 0
    %928 = vmatpush2.bf16.msra.mxu0 0
    %929 = vmatprep.subr.bf16.mxu0 0
    %930 = vmatpush2.bf16.msra.mxu0 0
    %931 = vmatprep.subr.bf16.mxu0 0
    %932 = vmatpush2.bf16.msra.mxu0 0
    %933 = vmatprep.subr.bf16.mxu0 0
    %934 = vmatpush2.bf16.msra.mxu0 0
    %935 = vmatprep.subr.bf16.mxu0 0
    %936 = vmatpush2.bf16.msra.mxu0 0
    %937 = vmatprep.subr.bf16.mxu0 0
    %938 = vmatpush2.bf16.msra.mxu0 0
    %939 = vmatprep.subr.bf16.mxu0 0
    %940 = vmatpush2.bf16.msra.mxu0 0
    %941 = vmatprep.subr.bf16.mxu0 0
    %942 = vmatpush2.bf16.msra.mxu0 0
    %943 = vmatprep.mubr.bf16.mxu0 0
    %944 = vmatmul.mubr.bf16.gmra.mxu0 %v856
    %v945 = vpop.f32.mrf.mxu0
    %v946 = vadd.f32 0.0, %v945
    %v947 = vpop.f32.mrf.mxu0
    %v948 = vadd.f32 0.0, %v947
    %v949 = vpop.f32.mrf.mxu0
    %v950 = vpop.f32.mrf.mxu0
    %951 = vdwg.mxu0
    %952 = vrot.lane.b32.xlu0 %v905, 127
    %v953 = vpop.permute.xlu0 %952
    %954 = vrot.lane.b32.xlu0 %v907, 127
    %v955 = vpop.permute.xlu0 %954
    %956 = vrot.lane.b32.xlu0 %v946, 127
    %v957 = vpop.permute.xlu0 %956
    %958 = vrot.lane.b32.xlu0 %v948, 127
    %v959 = vpop.permute.xlu0 %958
    %v960 = vsel %vm74, %v957, %v959
    %v961 = vsel %vm74, %v955, %v957
    %v962 = vsel %vm74, %v953, %v955
    %v963 = vsel %vm74, %v959, %v953
    %964 = vrot.lane.b32.xlu0 %v905, 126
    %v965 = vpop.permute.xlu0 %964
    %966 = vrot.lane.b32.xlu0 %v907, 126
    %v967 = vpop.permute.xlu0 %966
    %968 = vrot.lane.b32.xlu0 %v946, 126
    %v969 = vpop.permute.xlu0 %968
    %970 = vrot.lane.b32.xlu0 %v948, 126
    %v971 = vpop.permute.xlu0 %970
    %v972 = vsel %vm87, %v969, %v971
    %v973 = vsel %vm87, %v967, %v969
    %v974 = vsel %vm87, %v965, %v967
    %v975 = vsel %vm87, %v971, %v965
    %976 = vrot.lane.b32.xlu0 %v905, 112
    %v977 = vpop.permute.xlu0 %976
    %978 = vrot.lane.b32.xlu0 %v907, 112
    %v979 = vpop.permute.xlu0 %978
    %980 = vrot.lane.b32.xlu0 %v946, 112
    %v981 = vpop.permute.xlu0 %980
    %982 = vrot.lane.b32.xlu0 %v948, 112
    %v983 = vpop.permute.xlu0 %982
    %v984 = vsel %vm100, %v981, %v983
    %v985 = vsel %vm100, %v979, %v981
    %v986 = vsel %vm100, %v977, %v979
    %v987 = vsel %vm100, %v983, %v977
    %988 = vrot.lane.b32.xlu0 %v905, 111
    %v989 = vpop.permute.xlu0 %988
    %990 = vrot.lane.b32.xlu0 %v907, 111
    %v991 = vpop.permute.xlu0 %990
    %992 = vrot.lane.b32.xlu0 %v946, 111
    %v993 = vpop.permute.xlu0 %992
    %994 = vrot.lane.b32.xlu0 %v948, 111
    %v995 = vpop.permute.xlu0 %994
    %v996 = vsel %vm113, %v993, %v995
    %v997 = vsel %vm113, %v991, %v993
    %v998 = vsel %vm113, %v989, %v991
    %v999 = vsel %vm113, %v995, %v989
    %1000 = vrot.lane.b32.xlu0 %v905, 110
    %v1001 = vpop.permute.xlu0 %1000
    %1002 = vrot.lane.b32.xlu0 %v907, 110
    %v1003 = vpop.permute.xlu0 %1002
    %1004 = vrot.lane.b32.xlu0 %v946, 110
    %v1005 = vpop.permute.xlu0 %1004
    %1006 = vrot.lane.b32.xlu0 %v948, 110
    %v1007 = vpop.permute.xlu0 %1006
    %v1008 = vsel %vm126, %v1005, %v1007
    %v1009 = vsel %vm126, %v1003, %v1005
    %v1010 = vsel %vm126, %v1001, %v1003
    %v1011 = vsel %vm126, %v1007, %v1001
    %1012 = vrot.lane.b32.xlu0 %v905, 96
    %v1013 = vpop.permute.xlu0 %1012
    %1014 = vrot.lane.b32.xlu0 %v907, 96
    %v1015 = vpop.permute.xlu0 %1014
    %1016 = vrot.lane.b32.xlu0 %v946, 96
    %v1017 = vpop.permute.xlu0 %1016
    %1018 = vrot.lane.b32.xlu0 %v948, 96
    %v1019 = vpop.permute.xlu0 %1018
    %v1020 = vsel %vm139, %v1017, %v1019
    %v1021 = vsel %vm139, %v1015, %v1017
    %v1022 = vsel %vm139, %v1013, %v1015
    %v1023 = vsel %vm139, %v1019, %v1013
    %1024 = vrot.lane.b32.xlu0 %v905, 95
    %v1025 = vpop.permute.xlu0 %1024
    %1026 = vrot.lane.b32.xlu0 %v907, 95
    %v1027 = vpop.permute.xlu0 %1026
    %1028 = vrot.lane.b32.xlu0 %v946, 95
    %v1029 = vpop.permute.xlu0 %1028
    %1030 = vrot.lane.b32.xlu0 %v948, 95
    %v1031 = vpop.permute.xlu0 %1030
    %v1032 = vsel %vm152, %v1029, %v1031
    %v1033 = vsel %vm152, %v1027, %v1029
    %v1034 = vsel %vm152, %v1025, %v1027
    %v1035 = vsel %vm152, %v1031, %v1025
    %1036 = vrot.lane.b32.xlu0 %v905, 94
    %v1037 = vpop.permute.xlu0 %1036
    %1038 = vrot.lane.b32.xlu0 %v907, 94
    %v1039 = vpop.permute.xlu0 %1038
    %1040 = vrot.lane.b32.xlu0 %v946, 94
    %v1041 = vpop.permute.xlu0 %1040
    %1042 = vrot.lane.b32.xlu0 %v948, 94
    %v1043 = vpop.permute.xlu0 %1042
    %v1044 = vsel %vm165, %v1041, %v1043
    %v1045 = vsel %vm165, %v1039, %v1041
    %v1046 = vsel %vm165, %v1037, %v1039
    %v1047 = vsel %vm165, %v1043, %v1037
    %v1048 = vpack.c.bf16 %v962, %v905
    %v1049 = vpack.c.bf16 %v961, %v907
    %v1050 = vpack.c.bf16 %v960, %v946
    %v1051 = vpack.c.bf16 %v963, %v948
    %v1052 = vpack.c.bf16 %v986, %v974
    %v1053 = vpack.c.bf16 %v985, %v973
    %v1054 = vpack.c.bf16 %v984, %v972
    %v1055 = vpack.c.bf16 %v987, %v975
    %v1056 = vpack.c.bf16 %v1010, %v998
    %v1057 = vpack.c.bf16 %v1009, %v997
    %v1058 = vpack.c.bf16 %v1008, %v996
    %v1059 = vpack.c.bf16 %v1011, %v999
    %v1060 = vpack.c.bf16 %v1034, %v1022
    %v1061 = vpack.c.bf16 %v1033, %v1021
    %v1062 = vpack.c.bf16 %v1032, %v1020
    %v1063 = vpack.c.bf16 %v1035, %v1023
    %v1064 = vpack.c.bf16 %v1046, %v1046
    %v1065 = vpack.c.bf16 %v1045, %v1045
    %v1066 = vpack.c.bf16 %v1044, %v1044
    %v1067 = vpack.c.bf16 %v1047, %v1047
    %v1068 = vld [vmem:[%s7] sm:$0xf]
    %v1070 = vsel %vm191, %v1068, 0
    %v1073 = vsel %vm195, %v1064, 0
    %v1076 = vsel %vm195, %v1065, 0
    %v1079 = vsel %vm195, %v1066, 0
    %v1082 = vsel %vm195, %v1067, 0
    %1084 = vmatprep.subr.bf16.mxu0 0
    %1085 = vmatpush1.bf16.msra.mxu0 0
    %1086 = vmatprep.subr.bf16.mxu0 0
    %1087 = vmatpush1.bf16.msra.mxu0 0
    %1088 = vmatprep.subr.bf16.mxu0 0
    %1089 = vmatpush1.bf16.msra.mxu0 0
    %1090 = vmatprep.subr.bf16.mxu0 %v1076
    %1091 = vmatpush1.bf16.msra.mxu0 %v1073
    %1092 = vmatprep.subr.bf16.mxu0 %v1061
    %1093 = vmatpush1.bf16.msra.mxu0 %v1060
    %1094 = vmatprep.subr.bf16.mxu0 %v1057
    %1095 = vmatpush1.bf16.msra.mxu0 %v1056
    %1096 = vmatprep.subr.bf16.mxu0 %v1053
    %1097 = vmatpush1.bf16.msra.mxu0 %v1052
    %1098 = vmatprep.subr.bf16.mxu0 %v1049
    %1099 = vmatpush1.bf16.msra.mxu0 %v1048
    %1100 = vmatprep.subr.bf16.mxu0 0
    %1101 = vmatpush2.bf16.msra.mxu0 0
    %1102 = vmatprep.subr.bf16.mxu0 0
    %1103 = vmatpush2.bf16.msra.mxu0 0
    %1104 = vmatprep.subr.bf16.mxu0 0
    %1105 = vmatpush2.bf16.msra.mxu0 0
    %1106 = vmatprep.subr.bf16.mxu0 0
    %1107 = vmatpush2.bf16.msra.mxu0 0
    %1108 = vmatprep.subr.bf16.mxu0 0
    %1109 = vmatpush2.bf16.msra.mxu0 0
    %1110 = vmatprep.subr.bf16.mxu0 0
    %1111 = vmatpush2.bf16.msra.mxu0 0
    %1112 = vmatprep.subr.bf16.mxu0 0
    %1113 = vmatpush2.bf16.msra.mxu0 0
    %1114 = vmatprep.subr.bf16.mxu0 0
    %1115 = vmatpush2.bf16.msra.mxu0 0
    %1116 = vmatprep.mubr.bf16.mxu0 0
    %1117 = vmatmul.mubr.bf16.gmra.mxu0 %v1070
    %v1118 = vpop.f32.mrf.mxu0
    %v1119 = vadd.f32 0.0, %v1118
    %v1120 = vpop.f32.mrf.mxu0
    %v1121 = vadd.f32 0.0, %v1120
    %v1122 = vpop.f32.mrf.mxu0
    %v1123 = vpop.f32.mrf.mxu0
    %1124 = vdwg.mxu0
    %1125 = vmatprep.subr.bf16.mxu0 0
    %1126 = vmatpush1.bf16.msra.mxu0 0
    %1127 = vmatprep.subr.bf16.mxu0 0
    %1128 = vmatpush1.bf16.msra.mxu0 0
    %1129 = vmatprep.subr.bf16.mxu0 0
    %1130 = vmatpush1.bf16.msra.mxu0 0
    %1131 = vmatprep.subr.bf16.mxu0 %v1082
    %1132 = vmatpush1.bf16.msra.mxu0 %v1079
    %1133 = vmatprep.subr.bf16.mxu0 %v1063
    %1134 = vmatpush1.bf16.msra.mxu0 %v1062
    %1135 = vmatprep.subr.bf16.mxu0 %v1059
    %1136 = vmatpush1.bf16.msra.mxu0 %v1058
    %1137 = vmatprep.subr.bf16.mxu0 %v1055
    %1138 = vmatpush1.bf16.msra.mxu0 %v1054
    %1139 = vmatprep.subr.bf16.mxu0 %v1051
    %1140 = vmatpush1.bf16.msra.mxu0 %v1050
    %1141 = vmatprep.subr.bf16.mxu0 0
    %1142 = vmatpush2.bf16.msra.mxu0 0
    %1143 = vmatprep.subr.bf16.mxu0 0
    %1144 = vmatpush2.bf16.msra.mxu0 0
    %1145 = vmatprep.subr.bf16.mxu0 0
    %1146 = vmatpush2.bf16.msra.mxu0 0
    %1147 = vmatprep.subr.bf16.mxu0 0
    %1148 = vmatpush2.bf16.msra.mxu0 0
    %1149 = vmatprep.subr.bf16.mxu0 0
    %1150 = vmatpush2.bf16.msra.mxu0 0
    %1151 = vmatprep.subr.bf16.mxu0 0
    %1152 = vmatpush2.bf16.msra.mxu0 0
    %1153 = vmatprep.subr.bf16.mxu0 0
    %1154 = vmatpush2.bf16.msra.mxu0 0
    %1155 = vmatprep.subr.bf16.mxu0 0
    %1156 = vmatpush2.bf16.msra.mxu0 0
    %1157 = vmatprep.mubr.bf16.mxu0 0
    %1158 = vmatmul.mubr.bf16.gmra.mxu0 %v1070
    %v1159 = vpop.f32.mrf.mxu0
    %v1160 = vadd.f32 0.0, %v1159
    %v1161 = vpop.f32.mrf.mxu0
    %v1162 = vadd.f32 0.0, %v1161
    %v1163 = vpop.f32.mrf.mxu0
    %v1164 = vpop.f32.mrf.mxu0
    %1165 = vdwg.mxu0
    %v1166 = vmul.f32 %v1119, %v730
    %v1167 = vmul.f32 %v1121, %v731
    %v1168 = vmul.f32 %v1160, %v732
    %v1169 = vmul.f32 %v1162, %v733
    %v1170 = vadd.f32 %v1166, %v734
    %v1171 = vadd.f32 %v1167, %v735
    %v1172 = vadd.f32 %v1168, %v736
    %v1173 = vadd.f32 %v1169, %v737
    %v1174 = vmax.f32 %v1170, 0.0
    %v1175 = vmax.f32 %v1171, 0.0
    %v1176 = vmax.f32 %v1172, 0.0
    %v1177 = vmax.f32 %v1173, 0.0
    %v1178 = vld [vmem:[%s11] sm:$0x1f]
    %v1179 = vld [vmem:[%s12] sm:$0x1f]
    %v1180 = vld [vmem:[%s13] sm:$0x1f]
    %v1181 = vld [vmem:[%s13 + $0x8] sm:$0x1f]
    %v1182 = vld [vmem:[%s13 + $0x10] sm:$0x1f]
    %v1183 = vld [vmem:[%s13 + $0x18] sm:$0x1f]
    %v1184 = vld [vmem:[%s14] sm:$0xff]
    %1185 = vrot.lane.b32.xlu0 %v1174, 127
    %v1186 = vpop.permute.xlu0 %1185
    %1187 = vrot.lane.b32.xlu0 %v1175, 127
    %v1188 = vpop.permute.xlu0 %1187
    %1189 = vrot.lane.b32.xlu0 %v1176, 127
    %v1190 = vpop.permute.xlu0 %1189
    %1191 = vrot.lane.b32.xlu0 %v1177, 127
    %v1192 = vpop.permute.xlu0 %1191
    %v1193 = vsel %vm74, %v1190, %v1192
    %v1194 = vsel %vm74, %v1188, %v1190
    %v1195 = vsel %vm74, %v1186, %v1188
    %v1196 = vsel %vm74, %v1192, %v1186
    %1197 = vrot.lane.b32.xlu0 %v1174, 126
    %v1198 = vpop.permute.xlu0 %1197
    %1199 = vrot.lane.b32.xlu0 %v1175, 126
    %v1200 = vpop.permute.xlu0 %1199
    %1201 = vrot.lane.b32.xlu0 %v1176, 126
    %v1202 = vpop.permute.xlu0 %1201
    %1203 = vrot.lane.b32.xlu0 %v1177, 126
    %v1204 = vpop.permute.xlu0 %1203
    %v1205 = vsel %vm87, %v1202, %v1204
    %v1206 = vsel %vm87, %v1200, %v1202
    %v1207 = vsel %vm87, %v1198, %v1200
    %v1208 = vsel %vm87, %v1204, %v1198
    %1209 = vrot.lane.b32.xlu0 %v1174, 125
    %v1210 = vpop.permute.xlu0 %1209
    %1211 = vrot.lane.b32.xlu0 %v1175, 125
    %v1212 = vpop.permute.xlu0 %1211
    %1213 = vrot.lane.b32.xlu0 %v1176, 125
    %v1214 = vpop.permute.xlu0 %1213
    %1215 = vrot.lane.b32.xlu0 %v1177, 125
    %v1216 = vpop.permute.xlu0 %1215
    %vm1217 = vcmp.lt.s32.totalorder %v73, 125
    %v1218 = vsel %vm1217, %v1214, %v1216
    %v1219 = vsel %vm1217, %v1212, %v1214
    %v1220 = vsel %vm1217, %v1210, %v1212
    %v1221 = vsel %vm1217, %v1216, %v1210
    %1222 = vrot.lane.b32.xlu0 %v1174, 124
    %v1223 = vpop.permute.xlu0 %1222
    %1224 = vrot.lane.b32.xlu0 %v1175, 124
    %v1225 = vpop.permute.xlu0 %1224
    %1226 = vrot.lane.b32.xlu0 %v1176, 124
    %v1227 = vpop.permute.xlu0 %1226
    %1228 = vrot.lane.b32.xlu0 %v1177, 124
    %v1229 = vpop.permute.xlu0 %1228
    %vm1230 = vcmp.lt.s32.totalorder %v73, 124
    %v1231 = vsel %vm1230, %v1227, %v1229
    %v1232 = vsel %vm1230, %v1225, %v1227
    %v1233 = vsel %vm1230, %v1223, %v1225
    %v1234 = vsel %vm1230, %v1229, %v1223
    %1235 = vrot.lane.b32.xlu0 %v1174, 112
    %v1236 = vpop.permute.xlu0 %1235
    %1237 = vrot.lane.b32.xlu0 %v1175, 112
    %v1238 = vpop.permute.xlu0 %1237
    %1239 = vrot.lane.b32.xlu0 %v1176, 112
    %v1240 = vpop.permute.xlu0 %1239
    %1241 = vrot.lane.b32.xlu0 %v1177, 112
    %v1242 = vpop.permute.xlu0 %1241
    %v1243 = vsel %vm100, %v1240, %v1242
    %v1244 = vsel %vm100, %v1238, %v1240
    %v1245 = vsel %vm100, %v1236, %v1238
    %v1246 = vsel %vm100, %v1242, %v1236
    %1247 = vrot.lane.b32.xlu0 %v1174, 111
    %v1248 = vpop.permute.xlu0 %1247
    %1249 = vrot.lane.b32.xlu0 %v1175, 111
    %v1250 = vpop.permute.xlu0 %1249
    %1251 = vrot.lane.b32.xlu0 %v1176, 111
    %v1252 = vpop.permute.xlu0 %1251
    %1253 = vrot.lane.b32.xlu0 %v1177, 111
    %v1254 = vpop.permute.xlu0 %1253
    %v1255 = vsel %vm113, %v1252, %v1254
    %v1256 = vsel %vm113, %v1250, %v1252
    %v1257 = vsel %vm113, %v1248, %v1250
    %v1258 = vsel %vm113, %v1254, %v1248
    %1259 = vrot.lane.b32.xlu0 %v1174, 110
    %v1260 = vpop.permute.xlu0 %1259
    %1261 = vrot.lane.b32.xlu0 %v1175, 110
    %v1262 = vpop.permute.xlu0 %1261
    %1263 = vrot.lane.b32.xlu0 %v1176, 110
    %v1264 = vpop.permute.xlu0 %1263
    %1265 = vrot.lane.b32.xlu0 %v1177, 110
    %v1266 = vpop.permute.xlu0 %1265
    %v1267 = vsel %vm126, %v1264, %v1266
    %v1268 = vsel %vm126, %v1262, %v1264
    %v1269 = vsel %vm126, %v1260, %v1262
    %v1270 = vsel %vm126, %v1266, %v1260
    %1271 = vrot.lane.b32.xlu0 %v1174, 109
    %v1272 = vpop.permute.xlu0 %1271
    %1273 = vrot.lane.b32.xlu0 %v1175, 109
    %v1274 = vpop.permute.xlu0 %1273
    %1275 = vrot.lane.b32.xlu0 %v1176, 109
    %v1276 = vpop.permute.xlu0 %1275
    %1277 = vrot.lane.b32.xlu0 %v1177, 109
    %v1278 = vpop.permute.xlu0 %1277
    %vm1279 = vcmp.lt.s32.totalorder %v73, 109
    %v1280 = vsel %vm1279, %v1276, %v1278
    %v1281 = vsel %vm1279, %v1274, %v1276
    %v1282 = vsel %vm1279, %v1272, %v1274
    %v1283 = vsel %vm1279, %v1278, %v1272
    %1284 = vrot.lane.b32.xlu0 %v1174, 108
    %v1285 = vpop.permute.xlu0 %1284
    %1286 = vrot.lane.b32.xlu0 %v1175, 108
    %v1287 = vpop.permute.xlu0 %1286
    %1288 = vrot.lane.b32.xlu0 %v1176, 108
    %v1289 = vpop.permute.xlu0 %1288
    %1290 = vrot.lane.b32.xlu0 %v1177, 108
    %v1291 = vpop.permute.xlu0 %1290
    %vm1292 = vcmp.lt.s32.totalorder %v73, 108
    %v1293 = vsel %vm1292, %v1289, %v1291
    %v1294 = vsel %vm1292, %v1287, %v1289
    %v1295 = vsel %vm1292, %v1285, %v1287
    %v1296 = vsel %vm1292, %v1291, %v1285
    %1297 = vrot.lane.b32.xlu0 %v1174, 96
    %v1298 = vpop.permute.xlu0 %1297
    %1299 = vrot.lane.b32.xlu0 %v1175, 96
    %v1300 = vpop.permute.xlu0 %1299
    %1301 = vrot.lane.b32.xlu0 %v1176, 96
    %v1302 = vpop.permute.xlu0 %1301
    %1303 = vrot.lane.b32.xlu0 %v1177, 96
    %v1304 = vpop.permute.xlu0 %1303
    %v1305 = vsel %vm139, %v1302, %v1304
    %v1306 = vsel %vm139, %v1300, %v1302
    %v1307 = vsel %vm139, %v1298, %v1300
    %v1308 = vsel %vm139, %v1304, %v1298
    %1309 = vrot.lane.b32.xlu0 %v1174, 95
    %v1310 = vpop.permute.xlu0 %1309
    %1311 = vrot.lane.b32.xlu0 %v1175, 95
    %v1312 = vpop.permute.xlu0 %1311
    %1313 = vrot.lane.b32.xlu0 %v1176, 95
    %v1314 = vpop.permute.xlu0 %1313
    %1315 = vrot.lane.b32.xlu0 %v1177, 95
    %v1316 = vpop.permute.xlu0 %1315
    %v1317 = vsel %vm152, %v1314, %v1316
    %v1318 = vsel %vm152, %v1312, %v1314
    %v1319 = vsel %vm152, %v1310, %v1312
    %v1320 = vsel %vm152, %v1316, %v1310
    %1321 = vrot.lane.b32.xlu0 %v1174, 94
    %v1322 = vpop.permute.xlu0 %1321
    %1323 = vrot.lane.b32.xlu0 %v1175, 94
    %v1324 = vpop.permute.xlu0 %1323
    %1325 = vrot.lane.b32.xlu0 %v1176, 94
    %v1326 = vpop.permute.xlu0 %1325
    %1327 = vrot.lane.b32.xlu0 %v1177, 94
    %v1328 = vpop.permute.xlu0 %1327
    %v1329 = vsel %vm165, %v1326, %v1328
    %v1330 = vsel %vm165, %v1324, %v1326
    %v1331 = vsel %vm165, %v1322, %v1324
    %v1332 = vsel %vm165, %v1328, %v1322
    %1333 = vrot.lane.b32.xlu0 %v1174, 93
    %v1334 = vpop.permute.xlu0 %1333
    %1335 = vrot.lane.b32.xlu0 %v1175, 93
    %v1336 = vpop.permute.xlu0 %1335
    %1337 = vrot.lane.b32.xlu0 %v1176, 93
    %v1338 = vpop.permute.xlu0 %1337
    %1339 = vrot.lane.b32.xlu0 %v1177, 93
    %v1340 = vpop.permute.xlu0 %1339
    %vm1341 = vcmp.lt.s32.totalorder %v73, 93
    %v1342 = vsel %vm1341, %v1338, %v1340
    %v1343 = vsel %vm1341, %v1336, %v1338
    %v1344 = vsel %vm1341, %v1334, %v1336
    %v1345 = vsel %vm1341, %v1340, %v1334
    %1346 = vrot.lane.b32.xlu0 %v1174, 92
    %v1347 = vpop.permute.xlu0 %1346
    %1348 = vrot.lane.b32.xlu0 %v1175, 92
    %v1349 = vpop.permute.xlu0 %1348
    %1350 = vrot.lane.b32.xlu0 %v1176, 92
    %v1351 = vpop.permute.xlu0 %1350
    %1352 = vrot.lane.b32.xlu0 %v1177, 92
    %v1353 = vpop.permute.xlu0 %1352
    %vm1354 = vcmp.lt.s32.totalorder %v73, 92
    %v1355 = vsel %vm1354, %v1351, %v1353
    %v1356 = vsel %vm1354, %v1349, %v1351
    %v1357 = vsel %vm1354, %v1347, %v1349
    %v1358 = vsel %vm1354, %v1353, %v1347
    %1359 = vrot.lane.b32.xlu0 %v1174, 80
    %v1360 = vpop.permute.xlu0 %1359
    %1361 = vrot.lane.b32.xlu0 %v1175, 80
    %v1362 = vpop.permute.xlu0 %1361
    %1363 = vrot.lane.b32.xlu0 %v1176, 80
    %v1364 = vpop.permute.xlu0 %1363
    %1365 = vrot.lane.b32.xlu0 %v1177, 80
    %v1366 = vpop.permute.xlu0 %1365
    %vm1367 = vcmp.lt.s32.totalorder %v73, 80
    %v1368 = vsel %vm1367, %v1364, %v1366
    %v1369 = vsel %vm1367, %v1362, %v1364
    %v1370 = vsel %vm1367, %v1360, %v1362
    %v1371 = vsel %vm1367, %v1366, %v1360
    %1372 = vrot.lane.b32.xlu0 %v1174, 79
    %v1373 = vpop.permute.xlu0 %1372
    %1374 = vrot.lane.b32.xlu0 %v1175, 79
    %v1375 = vpop.permute.xlu0 %1374
    %1376 = vrot.lane.b32.xlu0 %v1176, 79
    %v1377 = vpop.permute.xlu0 %1376
    %1378 = vrot.lane.b32.xlu0 %v1177, 79
    %v1379 = vpop.permute.xlu0 %1378
    %vm1380 = vcmp.lt.s32.totalorder %v73, 79
    %v1381 = vsel %vm1380, %v1377, %v1379
    %v1382 = vsel %vm1380, %v1375, %v1377
    %v1383 = vsel %vm1380, %v1373, %v1375
    %v1384 = vsel %vm1380, %v1379, %v1373
    %1385 = vrot.lane.b32.xlu0 %v1174, 78
    %v1386 = vpop.permute.xlu0 %1385
    %1387 = vrot.lane.b32.xlu0 %v1175, 78
    %v1388 = vpop.permute.xlu0 %1387
    %1389 = vrot.lane.b32.xlu0 %v1176, 78
    %v1390 = vpop.permute.xlu0 %1389
    %1391 = vrot.lane.b32.xlu0 %v1177, 78
    %v1392 = vpop.permute.xlu0 %1391
    %vm1393 = vcmp.lt.s32.totalorder %v73, 78
    %v1394 = vsel %vm1393, %v1390, %v1392
    %v1395 = vsel %vm1393, %v1388, %v1390
    %v1396 = vsel %vm1393, %v1386, %v1388
    %v1397 = vsel %vm1393, %v1392, %v1386
    %1398 = vrot.lane.b32.xlu0 %v1174, 77
    %v1399 = vpop.permute.xlu0 %1398
    %1400 = vrot.lane.b32.xlu0 %v1175, 77
    %v1401 = vpop.permute.xlu0 %1400
    %1402 = vrot.lane.b32.xlu0 %v1176, 77
    %v1403 = vpop.permute.xlu0 %1402
    %1404 = vrot.lane.b32.xlu0 %v1177, 77
    %v1405 = vpop.permute.xlu0 %1404
    %vm1406 = vcmp.lt.s32.totalorder %v73, 77
    %v1407 = vsel %vm1406, %v1403, %v1405
    %v1408 = vsel %vm1406, %v1401, %v1403
    %v1409 = vsel %vm1406, %v1399, %v1401
    %v1410 = vsel %vm1406, %v1405, %v1399
    %1411 = vrot.lane.b32.xlu0 %v1174, 76
    %v1412 = vpop.permute.xlu0 %1411
    %1413 = vrot.lane.b32.xlu0 %v1175, 76
    %v1414 = vpop.permute.xlu0 %1413
    %1415 = vrot.lane.b32.xlu0 %v1176, 76
    %v1416 = vpop.permute.xlu0 %1415
    %1417 = vrot.lane.b32.xlu0 %v1177, 76
    %v1418 = vpop.permute.xlu0 %1417
    %vm1419 = vcmp.lt.s32.totalorder %v73, 76
    %v1420 = vsel %vm1419, %v1416, %v1418
    %v1421 = vsel %vm1419, %v1414, %v1416
    %v1422 = vsel %vm1419, %v1412, %v1414
    %v1423 = vsel %vm1419, %v1418, %v1412
    %1424 = vrot.lane.b32.xlu0 %v1174, 64
    %v1425 = vpop.permute.xlu0 %1424
    %1426 = vrot.lane.b32.xlu0 %v1175, 64
    %v1427 = vpop.permute.xlu0 %1426
    %1428 = vrot.lane.b32.xlu0 %v1176, 64
    %v1429 = vpop.permute.xlu0 %1428
    %1430 = vrot.lane.b32.xlu0 %v1177, 64
    %v1431 = vpop.permute.xlu0 %1430
    %vm1432 = vcmp.lt.s32.totalorder %v73, 64
    %v1433 = vsel %vm1432, %v1429, %v1431
    %v1434 = vsel %vm1432, %v1427, %v1429
    %v1435 = vsel %vm1432, %v1425, %v1427
    %v1436 = vsel %vm1432, %v1431, %v1425
    %1437 = vrot.lane.b32.xlu0 %v1174, 63
    %v1438 = vpop.permute.xlu0 %1437
    %1439 = vrot.lane.b32.xlu0 %v1175, 63
    %v1440 = vpop.permute.xlu0 %1439
    %1441 = vrot.lane.b32.xlu0 %v1176, 63
    %v1442 = vpop.permute.xlu0 %1441
    %1443 = vrot.lane.b32.xlu0 %v1177, 63
    %v1444 = vpop.permute.xlu0 %1443
    %vm1445 = vcmp.lt.s32.totalorder %v73, 63
    %v1446 = vsel %vm1445, %v1442, %v1444
    %v1447 = vsel %vm1445, %v1440, %v1442
    %v1448 = vsel %vm1445, %v1438, %v1440
    %v1449 = vsel %vm1445, %v1444, %v1438
    %1450 = vrot.lane.b32.xlu0 %v1174, 62
    %v1451 = vpop.permute.xlu0 %1450
    %1452 = vrot.lane.b32.xlu0 %v1175, 62
    %v1453 = vpop.permute.xlu0 %1452
    %1454 = vrot.lane.b32.xlu0 %v1176, 62
    %v1455 = vpop.permute.xlu0 %1454
    %1456 = vrot.lane.b32.xlu0 %v1177, 62
    %v1457 = vpop.permute.xlu0 %1456
    %vm1458 = vcmp.lt.s32.totalorder %v73, 62
    %v1459 = vsel %vm1458, %v1455, %v1457
    %v1460 = vsel %vm1458, %v1453, %v1455
    %v1461 = vsel %vm1458, %v1451, %v1453
    %v1462 = vsel %vm1458, %v1457, %v1451
    %1463 = vrot.lane.b32.xlu0 %v1174, 61
    %v1464 = vpop.permute.xlu0 %1463
    %1465 = vrot.lane.b32.xlu0 %v1175, 61
    %v1466 = vpop.permute.xlu0 %1465
    %1467 = vrot.lane.b32.xlu0 %v1176, 61
    %v1468 = vpop.permute.xlu0 %1467
    %1469 = vrot.lane.b32.xlu0 %v1177, 61
    %v1470 = vpop.permute.xlu0 %1469
    %vm1471 = vcmp.lt.s32.totalorder %v73, 61
    %v1472 = vsel %vm1471, %v1468, %v1470
    %v1473 = vsel %vm1471, %v1466, %v1468
    %v1474 = vsel %vm1471, %v1464, %v1466
    %v1475 = vsel %vm1471, %v1470, %v1464
    %1476 = vrot.lane.b32.xlu0 %v1174, 60
    %v1477 = vpop.permute.xlu0 %1476
    %1478 = vrot.lane.b32.xlu0 %v1175, 60
    %v1479 = vpop.permute.xlu0 %1478
    %1480 = vrot.lane.b32.xlu0 %v1176, 60
    %v1481 = vpop.permute.xlu0 %1480
    %1482 = vrot.lane.b32.xlu0 %v1177, 60
    %v1483 = vpop.permute.xlu0 %1482
    %vm1484 = vcmp.lt.s32.totalorder %v73, 60
    %v1485 = vsel %vm1484, %v1481, %v1483
    %v1486 = vsel %vm1484, %v1479, %v1481
    %v1487 = vsel %vm1484, %v1477, %v1479
    %v1488 = vsel %vm1484, %v1483, %v1477
    %v1489 = vpack.c.bf16 %v1195, %v1174
    %v1490 = vpack.c.bf16 %v1194, %v1175
    %v1491 = vpack.c.bf16 %v1193, %v1176
    %v1492 = vpack.c.bf16 %v1196, %v1177
    %v1493 = vpack.c.bf16 %v1220, %v1207
    %v1494 = vpack.c.bf16 %v1219, %v1206
    %v1495 = vpack.c.bf16 %v1218, %v1205
    %v1496 = vpack.c.bf16 %v1221, %v1208
    %v1497 = vpack.c.bf16 %v1245, %v1233
    %v1498 = vpack.c.bf16 %v1244, %v1232
    %v1499 = vpack.c.bf16 %v1243, %v1231
    %v1500 = vpack.c.bf16 %v1246, %v1234
    %v1501 = vpack.c.bf16 %v1269, %v1257
    %v1502 = vpack.c.bf16 %v1268, %v1256
    %v1503 = vpack.c.bf16 %v1267, %v1255
    %v1504 = vpack.c.bf16 %v1270, %v1258
    %v1505 = vpack.c.bf16 %v1295, %v1282
    %v1506 = vpack.c.bf16 %v1294, %v1281
    %v1507 = vpack.c.bf16 %v1293, %v1280
    %v1508 = vpack.c.bf16 %v1296, %v1283
    %v1509 = vpack.c.bf16 %v1319, %v1307
    %v1510 = vpack.c.bf16 %v1318, %v1306
    %v1511 = vpack.c.bf16 %v1317, %v1305
    %v1512 = vpack.c.bf16 %v1320, %v1308
    %v1513 = vpack.c.bf16 %v1344, %v1331
    %v1514 = vpack.c.bf16 %v1343, %v1330
    %v1515 = vpack.c.bf16 %v1342, %v1329
    %v1516 = vpack.c.bf16 %v1345, %v1332
    %v1517 = vpack.c.bf16 %v1370, %v1357
    %v1518 = vpack.c.bf16 %v1369, %v1356
    %v1519 = vpack.c.bf16 %v1368, %v1355
    %v1520 = vpack.c.bf16 %v1371, %v1358
    %v1521 = vpack.c.bf16 %v1396, %v1383
    %v1522 = vpack.c.bf16 %v1395, %v1382
    %v1523 = vpack.c.bf16 %v1394, %v1381
    %v1524 = vpack.c.bf16 %v1397, %v1384
    %v1525 = vpack.c.bf16 %v1422, %v1409
    %v1526 = vpack.c.bf16 %v1421, %v1408
    %v1527 = vpack.c.bf16 %v1420, %v1407
    %v1528 = vpack.c.bf16 %v1423, %v1410
    %v1529 = vpack.c.bf16 %v1448, %v1435
    %v1530 = vpack.c.bf16 %v1447, %v1434
    %v1531 = vpack.c.bf16 %v1446, %v1433
    %v1532 = vpack.c.bf16 %v1449, %v1436
    %v1533 = vpack.c.bf16 %v1474, %v1461
    %v1534 = vpack.c.bf16 %v1473, %v1460
    %v1535 = vpack.c.bf16 %v1472, %v1459
    %v1536 = vpack.c.bf16 %v1475, %v1462
    %v1537 = vpack.c.bf16 %v1487, %v1487
    %v1538 = vpack.c.bf16 %v1486, %v1486
    %v1539 = vpack.c.bf16 %v1485, %v1485
    %v1540 = vpack.c.bf16 %v1488, %v1488
    %v1541 = vld [vmem:[%s10] sm:$0x77]
    %v1543 = vunpack.c.l.b16 %v1541
    %v1544 = vunpack.c.h.b16 %v1541
    %v1545 = vpack.c.b16 %v1543, %v1543
    %v1546 = vpack.c.b16 %v1544, %v1544
    %v1549 = vsel %vm191, %v1546, 0
    %v1552 = vsel %vm195, %v1537, 0
    %v1555 = vsel %vm195, %v1538, 0
    %v1558 = vsel %vm195, %v1539, 0
    %v1561 = vsel %vm195, %v1540, 0
    %1563 = vmatprep.subr.bf16.mxu0 %v1518
    %1564 = vmatpush1.bf16.msra.mxu0 %v1517
    %1565 = vmatprep.subr.bf16.mxu0 %v1514
    %1566 = vmatpush1.bf16.msra.mxu0 %v1513
    %1567 = vmatprep.subr.bf16.mxu0 %v1510
    %1568 = vmatpush1.bf16.msra.mxu0 %v1509
    %1569 = vmatprep.subr.bf16.mxu0 %v1506
    %1570 = vmatpush1.bf16.msra.mxu0 %v1505
    %1571 = vmatprep.subr.bf16.mxu0 %v1502
    %1572 = vmatpush1.bf16.msra.mxu0 %v1501
    %1573 = vmatprep.subr.bf16.mxu0 %v1498
    %1574 = vmatpush1.bf16.msra.mxu0 %v1497
    %1575 = vmatprep.subr.bf16.mxu0 %v1494
    %1576 = vmatpush1.bf16.msra.mxu0 %v1493
    %1577 = vmatprep.subr.bf16.mxu0 %v1490
    %1578 = vmatpush1.bf16.msra.mxu0 %v1489
    %1579 = vmatprep.subr.bf16.mxu0 0
    %1580 = vmatpush2.bf16.msra.mxu0 0
    %1581 = vmatprep.subr.bf16.mxu0 0
    %1582 = vmatpush2.bf16.msra.mxu0 0
    %1583 = vmatprep.subr.bf16.mxu0 0
    %1584 = vmatpush2.bf16.msra.mxu0 0
    %1585 = vmatprep.subr.bf16.mxu0 %v1555
    %1586 = vmatpush2.bf16.msra.mxu0 %v1552
    %1587 = vmatprep.subr.bf16.mxu0 %v1534
    %1588 = vmatpush2.bf16.msra.mxu0 %v1533
    %1589 = vmatprep.subr.bf16.mxu0 %v1530
    %1590 = vmatpush2.bf16.msra.mxu0 %v1529
    %1591 = vmatprep.subr.bf16.mxu0 %v1526
    %1592 = vmatpush2.bf16.msra.mxu0 %v1525
    %1593 = vmatprep.subr.bf16.mxu0 %v1522
    %1594 = vmatpush2.bf16.msra.mxu0 %v1521
    %1595 = vmatprep.mubr.bf16.mxu0 %v1549
    %1596 = vmatmul.mubr.bf16.gmra.mxu0 %v1545
    %v1597 = vpop.f32.mrf.mxu0
    %v1598 = vadd.f32 0.0, %v1597
    %v1599 = vpop.f32.mrf.mxu0
    %v1600 = vadd.f32 0.0, %v1599
    %v1601 = vpop.f32.mrf.mxu0
    %v1602 = vpop.f32.mrf.mxu0
    %1603 = vdwg.mxu0
    %1604 = vmatprep.subr.bf16.mxu0 %v1520
    %1605 = vmatpush1.bf16.msra.mxu0 %v1519
    %1606 = vmatprep.subr.bf16.mxu0 %v1516
    %1607 = vmatpush1.bf16.msra.mxu0 %v1515
    %1608 = vmatprep.subr.bf16.mxu0 %v1512
    %1609 = vmatpush1.bf16.msra.mxu0 %v1511
    %1610 = vmatprep.subr.bf16.mxu0 %v1508
    %1611 = vmatpush1.bf16.msra.mxu0 %v1507
    %1612 = vmatprep.subr.bf16.mxu0 %v1504
    %1613 = vmatpush1.bf16.msra.mxu0 %v1503
    %1614 = vmatprep.subr.bf16.mxu0 %v1500
    %1615 = vmatpush1.bf16.msra.mxu0 %v1499
    %1616 = vmatprep.subr.bf16.mxu0 %v1496
    %1617 = vmatpush1.bf16.msra.mxu0 %v1495
    %1618 = vmatprep.subr.bf16.mxu0 %v1492
    %1619 = vmatpush1.bf16.msra.mxu0 %v1491
    %1620 = vmatprep.subr.bf16.mxu0 0
    %1621 = vmatpush2.bf16.msra.mxu0 0
    %1622 = vmatprep.subr.bf16.mxu0 0
    %1623 = vmatpush2.bf16.msra.mxu0 0
    %1624 = vmatprep.subr.bf16.mxu0 0
    %1625 = vmatpush2.bf16.msra.mxu0 0
    %1626 = vmatprep.subr.bf16.mxu0 %v1561
    %1627 = vmatpush2.bf16.msra.mxu0 %v1558
    %1628 = vmatprep.subr.bf16.mxu0 %v1536
    %1629 = vmatpush2.bf16.msra.mxu0 %v1535
    %1630 = vmatprep.subr.bf16.mxu0 %v1532
    %1631 = vmatpush2.bf16.msra.mxu0 %v1531
    %1632 = vmatprep.subr.bf16.mxu0 %v1528
    %1633 = vmatpush2.bf16.msra.mxu0 %v1527
    %1634 = vmatprep.subr.bf16.mxu0 %v1524
    %1635 = vmatpush2.bf16.msra.mxu0 %v1523
    %1636 = vmatprep.mubr.bf16.mxu0 %v1549
    %1637 = vmatmul.mubr.bf16.gmra.mxu0 %v1545
    %v1638 = vpop.f32.mrf.mxu0
    %v1639 = vadd.f32 0.0, %v1638
    %v1640 = vpop.f32.mrf.mxu0
    %v1641 = vadd.f32 0.0, %v1640
    %v1642 = vpop.f32.mrf.mxu0
    %v1643 = vpop.f32.mrf.mxu0
    %1644 = vdwg.mxu0
    %1646 = vset.pattern.permute.xlu0 0
    %1647 = vperm.xlu0 %1646, %v1178
    %v1648 = vpop.permute.xlu0 %1647
    %v1650 = vmul.f32 %v1598, %v1648
    %v1651 = vmul.f32 %v1600, %v1648
    %v1652 = vmul.f32 %v1639, %v1648
    %v1653 = vmul.f32 %v1641, %v1648
    %1655 = vset.pattern.permute.xlu0 0
    %1656 = vperm.xlu0 %1655, %v1179
    %v1657 = vpop.permute.xlu0 %1656
    %v1659 = vadd.f32 %v1650, %v1657
    %v1660 = vadd.f32 %v1651, %v1657
    %v1661 = vadd.f32 %v1652, %v1657
    %v1662 = vadd.f32 %v1653, %v1657
    %vm1663 = vcmp.gt.f32.partialorder %v1659, 20.0
    %vm1664 = vcmp.gt.f32.partialorder %v1660, 20.0
    %vm1665 = vcmp.gt.f32.partialorder %v1661, 20.0
    %vm1666 = vcmp.gt.f32.partialorder %v1662, 20.0
    %v1667 = vmin.f32 %v1659, 20.0
    %v1668 = vmin.f32 %v1660, 20.0
    %v1669 = vmin.f32 %v1661, 20.0
    %v1670 = vmin.f32 %v1662, 20.0
    %v1671 = vmul.f32 %v1667, 1.442695
    %v1672 = vpow.pop %v1671
    %v1673 = vmul.f32 %v1668, 1.442695
    %v1674 = vpow.pop %v1673
    %v1675 = vmul.f32 %v1669, 1.442695
    %v1676 = vpow.pop %v1675
    %v1677 = vmul.f32 %v1670, 1.442695
    %v1678 = vpow.pop %v1677
    %v1679 = vadd.f32 %v1672, 1.0
    %v1680 = vlog2.pop %v1679
    %v1681 = vmul.f32 %v1680, 0.6931472
    %v1682 = vmul.f32 -0.5, %v1672
    %v1683 = vadd.f32 %v1682, 1.0
    %v1684 = vmul.f32 %v1683, %v1672
    %v1685 = vand.u32 2147483647, %v1672
    %vm1686 = vcmp.lt.f32.partialorder %v1685, 0.0004427343
    %v1687 = vsel %vm1686, %v1684, %v1681
    %v1688 = vadd.f32 %v1674, 1.0
    %v1689 = vlog2.pop %v1688
    %v1690 = vmul.f32 %v1689, 0.6931472
    %v1691 = vmul.f32 -0.5, %v1674
    %v1692 = vadd.f32 %v1691, 1.0
    %v1693 = vmul.f32 %v1692, %v1674
    %v1694 = vand.u32 2147483647, %v1674
    %vm1695 = vcmp.lt.f32.partialorder %v1694, 0.0004427343
    %v1696 = vsel %vm1695, %v1693, %v1690
    %v1697 = vadd.f32 %v1676, 1.0
    %v1698 = vlog2.pop %v1697
    %v1699 = vmul.f32 %v1698, 0.6931472
    %v1700 = vmul.f32 -0.5, %v1676
    %v1701 = vadd.f32 %v1700, 1.0
    %v1702 = vmul.f32 %v1701, %v1676
    %v1703 = vand.u32 2147483647, %v1676
    %vm1704 = vcmp.lt.f32.partialorder %v1703, 0.0004427343
    %v1705 = vsel %vm1704, %v1702, %v1699
    %v1706 = vadd.f32 %v1678, 1.0
    %v1707 = vlog2.pop %v1706
    %v1708 = vmul.f32 %v1707, 0.6931472
    %v1709 = vmul.f32 -0.5, %v1678
    %v1710 = vadd.f32 %v1709, 1.0
    %v1711 = vmul.f32 %v1710, %v1678
    %v1712 = vand.u32 2147483647, %v1678
    %vm1713 = vcmp.lt.f32.partialorder %v1712, 0.0004427343
    %v1714 = vsel %vm1713, %v1711, %v1708
    %v1715 = vsel %vm1663, %v1659, %v1687
    %v1716 = vsel %vm1664, %v1660, %v1696
    %v1717 = vsel %vm1665, %v1661, %v1705
    %v1718 = vsel %vm1666, %v1662, %v1714
    %v1719 = vmul.f32 %v1715, %v1180
    %v1720 = vmul.f32 %v1716, %v1181
    %v1721 = vmul.f32 %v1717, %v1182
    %v1722 = vmul.f32 %v1718, %v1183
    %v1724 = vcombine.high %v1184, %v1184
    %v1726 = vunpack.c.l.s4 1983009808
    %v1727 = vunpack.c.0.s8 %v1726
    %v1728 = vlaneseq
    %v1729 = vshrl.u32 %v1728, 7
    %v1730 = vsub.s32 %v1727, %v1729
    %v1731 = vrot.slane %v1184, %v1730
    %v1733 = vunpack.c.l.s4 1983009808
    %v1734 = vunpack.c.0.s8 %v1733
    %v1735 = vlaneseq
    %v1736 = vshrl.u32 %v1735, 7
    %v1737 = vsub.s32 %v1734, %v1736
    %v1738 = vrot.slane %v1724, %v1737
    %v1739 = vcombine.high %v1731, %v1731
    %v1740 = vcombine.high %v1738, %v1738
    %1745 = vmatprep.subr.mxu0 0.0
    %1746 = vmatpush1.xpose.msra.mxu0 0.0
    %1747 = vmatprep.subr.mxu0 0.0
    %1748 = vmatpush1.xpose.msra.mxu0 0.0
    %1749 = vmatprep.subr.mxu0 0.0
    %1750 = vmatpush1.xpose.msra.mxu0 0.0
    %1751 = vmatprep.subr.mxu0 0.0
    %1752 = vmatpush1.xpose.msra.mxu0 0.0
    %1753 = vmatprep.subr.mxu0 0.0
    %1754 = vmatpush1.xpose.msra.mxu0 0.0
    %1755 = vmatprep.subr.mxu0 0.0
    %1756 = vmatpush1.xpose.msra.mxu0 0.0
    %1757 = vmatprep.subr.mxu0 0.0
    %1758 = vmatpush1.xpose.msra.mxu0 0.0
    %1759 = vmatprep.subr.mxu0 0.0
    %1760 = vmatpush1.xpose.msra.mxu0 0.0
    %1761 = vmatprep.subr.mxu0 0.0
    %1762 = vmatpush1.xpose.msra.mxu0 0.0
    %1763 = vmatprep.subr.mxu0 0.0
    %1764 = vmatpush1.xpose.msra.mxu0 0.0
    %1765 = vmatprep.subr.mxu0 0.0
    %1766 = vmatpush1.xpose.msra.mxu0 0.0
    %1767 = vmatprep.subr.mxu0 0.0
    %1768 = vmatpush1.xpose.msra.mxu0 0.0
    %1769 = vmatprep.subr.mxu0 0.0
    %1770 = vmatpush1.xpose.msra.mxu0 0.0
    %1771 = vmatprep.subr.mxu0 0.0
    %1772 = vmatpush1.xpose.msra.mxu0 0.0
    %1773 = vmatprep.subr.mxu0 0.0
    %1774 = vmatpush1.xpose.msra.mxu0 0.0
    %1775 = vmatprep.subr.mxu0 %v1720
    %1776 = vmatpush1.xpose.msra.mxu0 %v1719
    %1777 = vmatprep.subr.mxu0 0.0
    %1778 = vmatpush2.xpose.msra.mxu0 0.0
    %1779 = vmatprep.subr.mxu0 0.0
    %1780 = vmatpush2.xpose.msra.mxu0 0.0
    %1781 = vmatprep.subr.mxu0 0.0
    %1782 = vmatpush2.xpose.msra.mxu0 0.0
    %1783 = vmatprep.subr.mxu0 0.0
    %1784 = vmatpush2.xpose.msra.mxu0 0.0
    %1785 = vmatprep.subr.mxu0 0.0
    %1786 = vmatpush2.xpose.msra.mxu0 0.0
    %1787 = vmatprep.subr.mxu0 0.0
    %1788 = vmatpush2.xpose.msra.mxu0 0.0
    %1789 = vmatprep.subr.mxu0 0.0
    %1790 = vmatpush2.xpose.msra.mxu0 0.0
    %1791 = vmatprep.subr.mxu0 0.0
    %1792 = vmatpush2.xpose.msra.mxu0 0.0
    %1793 = vmatprep.subr.mxu0 0.0
    %1794 = vmatpush2.xpose.msra.mxu0 0.0
    %1795 = vmatprep.subr.mxu0 0.0
    %1796 = vmatpush2.xpose.msra.mxu0 0.0
    %1797 = vmatprep.subr.mxu0 0.0
    %1798 = vmatpush2.xpose.msra.mxu0 0.0
    %1799 = vmatprep.subr.mxu0 0.0
    %1800 = vmatpush2.xpose.msra.mxu0 0.0
    %1801 = vmatprep.subr.mxu0 0.0
    %1802 = vmatpush2.xpose.msra.mxu0 0.0
    %1803 = vmatprep.subr.mxu0 0.0
    %1804 = vmatpush2.xpose.msra.mxu0 0.0
    %1805 = vmatprep.subr.mxu0 0.0
    %1806 = vmatpush2.xpose.msra.mxu0 0.0
    %1807 = vmatprep.subr.mxu0 0.0
    %1808 = vmatpush2.xpose.msra.mxu0 0.0
    %1809 = vmatprep.mubr.f32.mxu0 %v1739
    %1810 = vmatmul.mubr.f32.gmra.mxu0 %v1731
    %v1811 = vpop.f32.mrf.mxu0
    %v1812 = vadd.f32 0.0, %v1811
    %v1813 = vpop.f32.mrf.mxu0
    %1814 = vdwg.mxu0
    %1815 = vmatprep.subr.mxu0 0.0
    %1816 = vmatpush1.xpose.msra.mxu0 0.0
    %1817 = vmatprep.subr.mxu0 0.0
    %1818 = vmatpush1.xpose.msra.mxu0 0.0
    %1819 = vmatprep.subr.mxu0 0.0
    %1820 = vmatpush1.xpose.msra.mxu0 0.0
    %1821 = vmatprep.subr.mxu0 0.0
    %1822 = vmatpush1.xpose.msra.mxu0 0.0
    %1823 = vmatprep.subr.mxu0 0.0
    %1824 = vmatpush1.xpose.msra.mxu0 0.0
    %1825 = vmatprep.subr.mxu0 0.0
    %1826 = vmatpush1.xpose.msra.mxu0 0.0
    %1827 = vmatprep.subr.mxu0 0.0
    %1828 = vmatpush1.xpose.msra.mxu0 0.0
    %1829 = vmatprep.subr.mxu0 0.0
    %1830 = vmatpush1.xpose.msra.mxu0 0.0
    %1831 = vmatprep.subr.mxu0 0.0
    %1832 = vmatpush1.xpose.msra.mxu0 0.0
    %1833 = vmatprep.subr.mxu0 0.0
    %1834 = vmatpush1.xpose.msra.mxu0 0.0
    %1835 = vmatprep.subr.mxu0 0.0
    %1836 = vmatpush1.xpose.msra.mxu0 0.0
    %1837 = vmatprep.subr.mxu0 0.0
    %1838 = vmatpush1.xpose.msra.mxu0 0.0
    %1839 = vmatprep.subr.mxu0 0.0
    %1840 = vmatpush1.xpose.msra.mxu0 0.0
    %1841 = vmatprep.subr.mxu0 0.0
    %1842 = vmatpush1.xpose.msra.mxu0 0.0
    %1843 = vmatprep.subr.mxu0 0.0
    %1844 = vmatpush1.xpose.msra.mxu0 0.0
    %1845 = vmatprep.subr.mxu0 %v1722
    %1846 = vmatpush1.xpose.msra.mxu0 %v1721
    %1847 = vmatprep.subr.mxu0 0.0
    %1848 = vmatpush2.xpose.msra.mxu0 0.0
    %1849 = vmatprep.subr.mxu0 0.0
    %1850 = vmatpush2.xpose.msra.mxu0 0.0
    %1851 = vmatprep.subr.mxu0 0.0
    %1852 = vmatpush2.xpose.msra.mxu0 0.0
    %1853 = vmatprep.subr.mxu0 0.0
    %1854 = vmatpush2.xpose.msra.mxu0 0.0
    %1855 = vmatprep.subr.mxu0 0.0
    %1856 = vmatpush2.xpose.msra.mxu0 0.0
    %1857 = vmatprep.subr.mxu0 0.0
    %1858 = vmatpush2.xpose.msra.mxu0 0.0
    %1859 = vmatprep.subr.mxu0 0.0
    %1860 = vmatpush2.xpose.msra.mxu0 0.0
    %1861 = vmatprep.subr.mxu0 0.0
    %1862 = vmatpush2.xpose.msra.mxu0 0.0
    %1863 = vmatprep.subr.mxu0 0.0
    %1864 = vmatpush2.xpose.msra.mxu0 0.0
    %1865 = vmatprep.subr.mxu0 0.0
    %1866 = vmatpush2.xpose.msra.mxu0 0.0
    %1867 = vmatprep.subr.mxu0 0.0
    %1868 = vmatpush2.xpose.msra.mxu0 0.0
    %1869 = vmatprep.subr.mxu0 0.0
    %1870 = vmatpush2.xpose.msra.mxu0 0.0
    %1871 = vmatprep.subr.mxu0 0.0
    %1872 = vmatpush2.xpose.msra.mxu0 0.0
    %1873 = vmatprep.subr.mxu0 0.0
    %1874 = vmatpush2.xpose.msra.mxu0 0.0
    %1875 = vmatprep.subr.mxu0 0.0
    %1876 = vmatpush2.xpose.msra.mxu0 0.0
    %1877 = vmatprep.subr.mxu0 0.0
    %1878 = vmatpush2.xpose.msra.mxu0 0.0
    %1879 = vmatprep.mubr.f32.mxu0 %v1740
    %1880 = vmatmul.mubr.f32.gmra.mxu0 %v1738
    %v1881 = vpop.f32.mrf.mxu0
    %v1882 = vadd.f32 %v1812, %v1881
    %v1883 = vpop.f32.mrf.mxu0
    %1884 = vdwg.mxu0
    %vm1885 = vcmask 33792
    %1886 = vst.msk [vmem:[#allocation2] sm:$0x3] %vm1885, %v1882
    // Predicated region
    $region62: #{retinotopic_forward.1} parent=1 // pred_check
      _
    $region63: #{retinotopic_forward.1} parent=1 // pred_check_branch
      %1888 = sbr.rel (0) target = $region65
    $region64: #{retinotopic_forward.1} parent=1 // pred_region
      %s1890 = ssub.s32 32, 32
      %1891 = vsyncadd [#allocation3], %s1890
      %s1893 = sshll.u32 [#allocation2], 4
      %s1894 = int_to_ptr.vmem [resolvable:$true] %s1893
      %1896 = dma.vmem_to_hbm [thread:$0]  %s1894, 32, %s15, [#allocation3]
    $region65: #{retinotopic_forward.1} parent=1 // pred_fallthru
      _
    // Predicated region
    $region66: #{retinotopic_forward.1} parent=1 // pred_check
      _
    $region67: #{retinotopic_forward.1} parent=1 // pred_check_branch
      %1898 = sbr.rel (0) target = $region69
    $region68: #{retinotopic_forward.1} parent=1 // pred_region
      %1899 = dma.done [#allocation3], 32
    $region69: #{retinotopic_forward.1} parent=1 // pred_fallthru
      _
    %1900 = vsyncpa [#allocation3], 1

</llo_original>
